<compile_context>
chip_gen: v5e
topology: v5e:2x2
jax: 0.10.0
libtpu: 0.0.40
codegen_flags: <defaults>
</compile_context>

<pallas_src>
import functools

import jax
import jax.numpy as jnp
from jax.experimental import pallas as pl
from jax.experimental.pallas import tpu as pltpu


# ----------------------------------------------------------------------------
# Fused kernel: conv1 GEMM + in-kernel conv2/conv3 GEMMs + fc1 + fc2.
# Geometry is specialized to the 36x36 input: conv1 out 8x8x32, conv2 out
# 3x3x64, conv3 out 1x1x64 (checked by asserts in the wrapper).
# ----------------------------------------------------------------------------
def _fused_dqn_kernel(p1_ref, w1_ref, b1_ref, w2_ref, b2_ref, w3_ref, b3_ref,
                      w4_ref, b4_ref, w5_ref, b5_ref, out_ref,
                      s1_ref, p2_ref, s2_ref, p3_ref, *, batch):
    B = batch
    f32 = jnp.float32

    # ---- conv1: one GEMM on the host-built patch matrix --------------------
    # p1 rows are ordered (hi%2, hi//2, wi%2, wi//2, b) over conv1's 8x8 output
    # grid (batch innermost).  With this ordering, every conv2 tap below reads
    # a single contiguous 19*B-row slice of s1.
    y1 = jnp.dot(p1_ref[...], w1_ref[...], preferred_element_type=f32)
    s1_ref[...] = jnp.maximum(y1 + b1_ref[...], 0.0)            # [64B, 32]

    # ---- conv2: ONE implicit GEMM, K = 16 taps * 32 ch = 512 ----------------
    # Patch row r = oh*8B + ow*B + b holds the 16-tap patch of conv2 output
    # position (oh, ow) for batch b; rows with (r mod 8B) >= 3B and rows >= 19B
    # are don't-care padding (multiplied but never read downstream).
    n = 19 * B
    for ki in range(4):
        for kj in range(4):
            t = ki * 4 + kj
            base = ((ki % 2) * 4 + ki // 2) * 8 * B + ((kj % 2) * 4 + kj // 2) * B
            p2_ref[0:n, t * 32:(t + 1) * 32] = s1_ref[base:base + n, :]
    y2 = jnp.dot(p2_ref[...], w2_ref[...], preferred_element_type=f32)
    s2_ref[...] = jnp.maximum(y2 + b2_ref[...], 0.0)            # [M2, 64]

    # ---- conv3: ONE GEMM, M = B, K = 9 positions * 64 ch = 576 --------------
    for p in range(9):
        src = (p // 3) * 8 * B + (p % 3) * B
        p3_ref[:, p * 64:(p + 1) * 64] = s2_ref[src:src + B, :]
    y3 = jnp.dot(p3_ref[...], w3_ref[...], preferred_element_type=f32)
    y3 = jnp.maximum(y3 + b3_ref[...], 0.0)                     # [B, 64]

    # ---- fc1 + fc2 (fc2 N pre-padded to a multiple of 128 lanes) ------------
    h = jnp.dot(y3, w4_ref[...], preferred_element_type=f32)
    h = jnp.maximum(h + b4_ref[...], 0.0)                       # [B, 512]
    q = jnp.dot(h, w5_ref[...], preferred_element_type=f32) + b5_ref[...]
    out_ref[...] = q.astype(out_ref.dtype)                      # [B, A_pad]


# ----------------------------------------------------------------------------
# Host-side glue (runs under jit, pure layout work).
# ----------------------------------------------------------------------------
def _conv1_patches(x_nhwc):
    """im2col for conv1 (k=8, s=4): rows ordered (hi%2, hi//2, wi%2, wi//2, b)
    with batch innermost; features ordered (c, ki, kj) to match prepared w1."""
    B, H, W, C = x_nhwc.shape
    kh = kw = 8
    s = 4
    Ho = (H - kh) // s + 1
    Wo = (W - kw) // s + 1
    assert Ho == 8 and Wo == 8, (Ho, Wo)
    taps = []
    for ki in range(kh):
        for kj in range(kw):
            taps.append(x_nhwc[:, ki:ki + s * Ho:s, kj:kj + s * Wo:s, :])
    p = jnp.stack(taps, axis=0)                          # [kh*kw, B, Ho, Wo, C]
    p = p.reshape(kh, kw, B, Ho // 2, 2, Wo // 2, 2, C)  # ki,kj,b,qh,pi,qw,pj,c
    p = p.transpose(4, 3, 6, 5, 2, 7, 0, 1)              # pi,qh,pj,qw,b,c,ki,kj
    return p.reshape(B * Ho * Wo, C * kh * kw)


def prepare_params(params):
    """One-time conversion of PyTorch-layout params into kernel-ready layouts."""
    c1w, c1b = params["conv1_w"], params["conv1_b"]              # [32, C, 8, 8]
    c2w, c2b = params["conv2_w"], params["conv2_b"]              # [64, 32, 4, 4]
    c3w, c3b = params["conv3_w"], params["conv3_b"]              # [64, 64, 3, 3]
    f1w, f1b = params["fc1_w"], params["fc1_b"]                  # [512, 64]
    f2w, f2b = params["fc2_w"], params["fc2_b"]                  # [A, 512]

    w1 = c1w.reshape(32, -1).T                                   # [(c,ki,kj), 32]
    w2 = c2w.transpose(2, 3, 1, 0).reshape(16 * 32, 64)          # [(ki,kj,c), 64]
    w3 = c3w.transpose(2, 3, 1, 0).reshape(9 * 64, 64)           # [(ki,kj,c), 64]
    assert f1w.shape[1] == 64, "kernel specialized to 1x1x64 conv3 output"
    w4 = f1w.T                                                   # [64, 512]

    A = f2w.shape[0]
    A_pad = ((A + 127) // 128) * 128                             # lane-dense output
    w5 = jnp.zeros((512, A_pad), f2w.dtype).at[:, :A].set(f2w.T)
    b5 = jnp.zeros((1, A_pad), f2b.dtype).at[:, :A].set(f2b.reshape(1, -1))

    return (w1, c1b.reshape(1, -1), w2, c2b.reshape(1, -1),
            w3, c3b.reshape(1, -1), w4, f1b.reshape(1, -1), w5, b5)


def dqn_forward(prepped, x, *, num_actions):
    """x: [B, C, H, W] float32 -> Q-values [B, num_actions]."""
    B, C, H, W = x.shape
    assert H == 36 and W == 36, "kernel specialized to 36x36 inputs (8x8->3x3->1x1)"
    (w1, b1, w2, b2, w3, b3, w4, b4, w5, b5) = prepped
    A_pad = w5.shape[1]

    x_nhwc = jnp.transpose(x, (0, 2, 3, 1))
    p1 = _conv1_patches(x_nhwc)                                  # [64B, C*64]

    M2 = ((19 * B + 7) // 8) * 8                                 # conv2 GEMM rows (padded)
    args = (p1, w1, b1, w2, b2, w3, b3, w4, b4, w5, b5)
    vmem = pl.BlockSpec(memory_space=pltpu.MemorySpace.VMEM)
    kernel = functools.partial(_fused_dqn_kernel, batch=B)

    flops = 2 * (p1.shape[0] * p1.shape[1] * 32      # conv1
                 + M2 * 512 * 64                     # conv2 (single GEMM)
                 + B * 576 * 64                      # conv3 (single GEMM)
                 + B * 64 * 512                      # fc1
                 + B * 512 * A_pad)                  # fc2
    bytes_accessed = 4 * (sum(int(a.size) for a in args) + B * A_pad)

    out = pl.pallas_call(
        kernel,
        out_shape=jax.ShapeDtypeStruct((B, A_pad), jnp.float32),
        in_specs=[vmem] * len(args),
        out_specs=vmem,
        scratch_shapes=[
            pltpu.VMEM((64 * B, 32), jnp.float32),   # conv1 output (parity row order)
            pltpu.VMEM((M2, 512), jnp.float32),      # conv2 patch matrix (512 lanes)
            pltpu.VMEM((M2, 64), jnp.float32),       # conv2 output
            pltpu.VMEM((B, 576), jnp.float32),       # conv3 patch matrix (576 lanes)
        ],
        cost_estimate=pl.CostEstimate(flops=flops, transcendentals=0,
                                      bytes_accessed=bytes_accessed),
    )(*args)
    return out[:, :num_actions]


# ----------------------------------------------------------------------------
# Parameter init (PyTorch layouts) + pure-JAX reference.
# ----------------------------------------------------------------------------
def conv_out_size(s, k, stride):
    return (s - k) // stride + 1


def init_dqn_params(key, input_shape, num_actions):
    C, H, W = input_shape
    h1 = conv_out_size(H, 8, 4); w1 = conv_out_size(W, 8, 4)
    h2 = conv_out_size(h1, 4, 2); w2 = conv_out_size(w1, 4, 2)
    h3 = conv_out_size(h2, 3, 1); w3 = conv_out_size(w2, 3, 1)
    feat = 64 * h3 * w3

    ks = jax.random.split(key, 10)
    scale = 0.05
    params = {
        "conv1_w": scale * jax.random.normal(ks[0], (32, C, 8, 8), jnp.float32),
        "conv1_b": scale * jax.random.normal(ks[1], (32,), jnp.float32),
        "conv2_w": scale * jax.random.normal(ks[2], (64, 32, 4, 4), jnp.float32),
        "conv2_b": scale * jax.random.normal(ks[3], (64,), jnp.float32),
        "conv3_w": scale * jax.random.normal(ks[4], (64, 64, 3, 3), jnp.float32),
        "conv3_b": scale * jax.random.normal(ks[5], (64,), jnp.float32),
        "fc1_w": scale * jax.random.normal(ks[6], (512, feat), jnp.float32),
        "fc1_b": scale * jax.random.normal(ks[7], (512,), jnp.float32),
        "fc2_w": scale * jax.random.normal(ks[8], (num_actions, 512), jnp.float32),
        "fc2_b": scale * jax.random.normal(ks[9], (num_actions,), jnp.float32),
    }
    return params, feat


def dqn_forward_ref(params, x):
    dn = ("NCHW", "OIHW", "NCHW")
    def conv(x, w, b, s):
        y = jax.lax.conv_general_dilated(x, w, (s, s), "VALID", dimension_numbers=dn)
        return jnp.maximum(y + b[None, :, None, None], 0.0)
    x = conv(x, params["conv1_w"], params["conv1_b"], 4)
    x = conv(x, params["conv2_w"], params["conv2_b"], 2)
    x = conv(x, params["conv3_w"], params["conv3_b"], 1)
    x = x.reshape(x.shape[0], -1)
    x = jnp.maximum(x @ params["fc1_w"].T + params["fc1_b"], 0.0)
    return x @ params["fc2_w"].T + params["fc2_b"]


if __name__ == "__main__":
    # 36x36 is the smallest valid spatial size for this conv stack
    # (8x8 -> 3x3 -> 1x1), giving feat = 64.
    B, C, H, W = 2, 4, 36, 36
    num_actions = 6

    key = jax.random.PRNGKey(0)
    pkey, xkey = jax.random.split(key)
    params, feat = init_dqn_params(pkey, (C, H, W), num_actions)
    assert feat == 64, feat
    x = jax.random.normal(xkey, (B, C, H, W), jnp.float32)

    prepped = prepare_params(params)           # one-time weight re-layout
    fwd = jax.jit(functools.partial(dqn_forward, num_actions=num_actions))

    out = jax.block_until_ready(fwd(prepped, x))
    ref = jax.block_until_ready(dqn_forward_ref(params, x))

    assert out.shape == (B, num_actions), out.shape
    max_err = float(jnp.max(jnp.abs(out - ref)))
    assert jnp.allclose(out, ref, atol=1e-3, rtol=1e-3), max_err
    print("KERNEL_OK")
</pallas_src>

<mosaic_0001>
module attributes {stable_mosaic.version = 11 : i64} {
  func.func @_fused_dqn_kernel(%arg0: memref<128x256xf32, #tpu.memory_space<vmem>>, %arg1: memref<256x32xf32, #tpu.memory_space<vmem>>, %arg2: memref<1x32xf32, #tpu.memory_space<vmem>>, %arg3: memref<512x64xf32, #tpu.memory_space<vmem>>, %arg4: memref<1x64xf32, #tpu.memory_space<vmem>>, %arg5: memref<576x64xf32, #tpu.memory_space<vmem>>, %arg6: memref<1x64xf32, #tpu.memory_space<vmem>>, %arg7: memref<64x512xf32, #tpu.memory_space<vmem>>, %arg8: memref<1x512xf32, #tpu.memory_space<vmem>>, %arg9: memref<512x128xf32, #tpu.memory_space<vmem>>, %arg10: memref<1x128xf32, #tpu.memory_space<vmem>>, %arg11: memref<2x128xf32, #tpu.memory_space<vmem>>, %arg12: memref<128x32xf32, #tpu.memory_space<vmem>>, %arg13: memref<40x512xf32, #tpu.memory_space<vmem>>, %arg14: memref<40x64xf32, #tpu.memory_space<vmem>>, %arg15: memref<2x576xf32, #tpu.memory_space<vmem>>) attributes {dimension_semantics = [], scalar_prefetch = 0 : i64, scratch_operands = 4 : i64, tpu.core_type = #tpu.core_type<tc>} {
    %c0 = arith.constant 0 : index
    %c0_0 = arith.constant 0 : index
    %0 = vector.load %arg0[%c0, %c0_0] : memref<128x256xf32, #tpu.memory_space<vmem>>, vector<128x256xf32>
    %c0_1 = arith.constant 0 : index
    %c0_2 = arith.constant 0 : index
    %1 = vector.load %arg1[%c0_1, %c0_2] : memref<256x32xf32, #tpu.memory_space<vmem>>, vector<256x32xf32>
    %cst = arith.constant dense<0.000000e+00> : vector<128x32xf32>
    %2 = tpu.matmul %0, %1, %cst {dimension_numbers = #tpu.dot_dimension_numbers<[1], [0], [0], [1], [0, 0, 1, 1], [], []>} : vector<128x256xf32>, vector<256x32xf32>, vector<128x32xf32> -> vector<128x32xf32>
    %c0_3 = arith.constant 0 : index
    %c0_4 = arith.constant 0 : index
    %3 = vector.load %arg2[%c0_3, %c0_4] : memref<1x32xf32, #tpu.memory_space<vmem>>, vector<1x32xf32>
    %4 = vector.broadcast %3 : vector<1x32xf32> to vector<128x32xf32>
    %5 = arith.addf %2, %4 : vector<128x32xf32>
    %cst_5 = arith.constant 0.000000e+00 : f32
    %6 = vector.broadcast %cst_5 : f32 to vector<128x32xf32>
    %7 = arith.maximumf %5, %6 : vector<128x32xf32>
    %c0_6 = arith.constant 0 : index
    %c0_7 = arith.constant 0 : index
    %8 = vector.load %arg12[%c0_6, %c0_7] : memref<128x32xf32, #tpu.memory_space<vmem>>, vector<128x32xf32>
    tpu.vector_store %arg12[%c0_6, %c0_7], %7 {strides = array<i32>} : memref<128x32xf32, #tpu.memory_space<vmem>>, vector<128x32xf32>,
    %c0_8 = arith.constant 0 : index
    %c0_9 = arith.constant 0 : index
    %9 = vector.load %arg12[%c0_8, %c0_9] : memref<128x32xf32, #tpu.memory_space<vmem>>, vector<38x32xf32>
    %c0_10 = arith.constant 0 : index
    %c0_11 = arith.constant 0 : index
    %10 = vector.load %arg13[%c0_10, %c0_11] : memref<40x512xf32, #tpu.memory_space<vmem>>, vector<38x32xf32>
    tpu.vector_store %arg13[%c0_10, %c0_11], %9 {strides = array<i32>} : memref<40x512xf32, #tpu.memory_space<vmem>>, vector<38x32xf32>,
    %c8 = arith.constant 8 : index
    %c0_12 = arith.constant 0 : index
    %11 = vector.load %arg12[%c8, %c0_12] : memref<128x32xf32, #tpu.memory_space<vmem>>, vector<38x32xf32>
    %c0_13 = arith.constant 0 : index
    %c32 = arith.constant 32 : index
    %12 = vector.load %arg13[%c0_13, %c32] : memref<40x512xf32, #tpu.memory_space<vmem>>, vector<38x32xf32>
    tpu.vector_store %arg13[%c0_13, %c32], %11 {strides = array<i32>} : memref<40x512xf32, #tpu.memory_space<vmem>>, vector<38x32xf32>,
    %c2 = arith.constant 2 : index
    %c0_14 = arith.constant 0 : index
    %13 = vector.load %arg12[%c2, %c0_14] : memref<128x32xf32, #tpu.memory_space<vmem>>, vector<38x32xf32>
    %c0_15 = arith.constant 0 : index
    %c64 = arith.constant 64 : index
    %14 = vector.load %arg13[%c0_15, %c64] : memref<40x512xf32, #tpu.memory_space<vmem>>, vector<38x32xf32>
    tpu.vector_store %arg13[%c0_15, %c64], %13 {strides = array<i32>} : memref<40x512xf32, #tpu.memory_space<vmem>>, vector<38x32xf32>,
    %c10 = arith.constant 10 : index
    %c0_16 = arith.constant 0 : index
    %15 = vector.load %arg12[%c10, %c0_16] : memref<128x32xf32, #tpu.memory_space<vmem>>, vector<38x32xf32>
    %c0_17 = arith.constant 0 : index
    %c96 = arith.constant 96 : index
    %16 = vector.load %arg13[%c0_17, %c96] : memref<40x512xf32, #tpu.memory_space<vmem>>, vector<38x32xf32>
    tpu.vector_store %arg13[%c0_17, %c96], %15 {strides = array<i32>} : memref<40x512xf32, #tpu.memory_space<vmem>>, vector<38x32xf32>,
    %c64_18 = arith.constant 64 : index
    %c0_19 = arith.constant 0 : index
    %17 = vector.load %arg12[%c64_18, %c0_19] : memref<128x32xf32, #tpu.memory_space<vmem>>, vector<38x32xf32>
    %c0_20 = arith.constant 0 : index
    %c128 = arith.constant 128 : index
    %18 = vector.load %arg13[%c0_20, %c128] : memref<40x512xf32, #tpu.memory_space<vmem>>, vector<38x32xf32>
    tpu.vector_store %arg13[%c0_20, %c128], %17 {strides = array<i32>} : memref<40x512xf32, #tpu.memory_space<vmem>>, vector<38x32xf32>,
    %c72 = arith.constant 72 : index
    %c0_21 = arith.constant 0 : index
    %19 = vector.load %arg12[%c72, %c0_21] : memref<128x32xf32, #tpu.memory_space<vmem>>, vector<38x32xf32>
    %c0_22 = arith.constant 0 : index
    %c160 = arith.constant 160 : index
    %20 = vector.load %arg13[%c0_22, %c160] : memref<40x512xf32, #tpu.memory_space<vmem>>, vector<38x32xf32>
    tpu.vector_store %arg13[%c0_22, %c160], %19 {strides = array<i32>} : memref<40x512xf32, #tpu.memory_space<vmem>>, vector<38x32xf32>,
    %c66 = arith.constant 66 : index
    %c0_23 = arith.constant 0 : index
    %21 = vector.load %arg12[%c66, %c0_23] : memref<128x32xf32, #tpu.memory_space<vmem>>, vector<38x32xf32>
    %c0_24 = arith.constant 0 : index
    %c192 = arith.constant 192 : index
    %22 = vector.load %arg13[%c0_24, %c192] : memref<40x512xf32, #tpu.memory_space<vmem>>, vector<38x32xf32>
    tpu.vector_store %arg13[%c0_24, %c192], %21 {strides = array<i32>} : memref<40x512xf32, #tpu.memory_space<vmem>>, vector<38x32xf32>,
    %c74 = arith.constant 74 : index
    %c0_25 = arith.constant 0 : index
    %23 = vector.load %arg12[%c74, %c0_25] : memref<128x32xf32, #tpu.memory_space<vmem>>, vector<38x32xf32>
    %c0_26 = arith.constant 0 : index
    %c224 = arith.constant 224 : index
    %24 = vector.load %arg13[%c0_26, %c224] : memref<40x512xf32, #tpu.memory_space<vmem>>, vector<38x32xf32>
    tpu.vector_store %arg13[%c0_26, %c224], %23 {strides = array<i32>} : memref<40x512xf32, #tpu.memory_space<vmem>>, vector<38x32xf32>,
    %c16 = arith.constant 16 : index
    %c0_27 = arith.constant 0 : index
    %25 = vector.load %arg12[%c16, %c0_27] : memref<128x32xf32, #tpu.memory_space<vmem>>, vector<38x32xf32>
    %c0_28 = arith.constant 0 : index
    %c256 = arith.constant 256 : index
    %26 = vector.load %arg13[%c0_28, %c256] : memref<40x512xf32, #tpu.memory_space<vmem>>, vector<38x32xf32>
    tpu.vector_store %arg13[%c0_28, %c256], %25 {strides = array<i32>} : memref<40x512xf32, #tpu.memory_space<vmem>>, vector<38x32xf32>,
    %c24 = arith.constant 24 : index
    %c0_29 = arith.constant 0 : index
    %27 = vector.load %arg12[%c24, %c0_29] : memref<128x32xf32, #tpu.memory_space<vmem>>, vector<38x32xf32>
    %c0_30 = arith.constant 0 : index
    %c288 = arith.constant 288 : index
    %28 = vector.load %arg13[%c0_30, %c288] : memref<40x512xf32, #tpu.memory_space<vmem>>, vector<38x32xf32>
    tpu.vector_store %arg13[%c0_30, %c288], %27 {strides = array<i32>} : memref<40x512xf32, #tpu.memory_space<vmem>>, vector<38x32xf32>,
    %c18 = arith.constant 18 : index
    %c0_31 = arith.constant 0 : index
    %29 = vector.load %arg12[%c18, %c0_31] : memref<128x32xf32, #tpu.memory_space<vmem>>, vector<38x32xf32>
    %c0_32 = arith.constant 0 : index
    %c320 = arith.constant 320 : index
    %30 = vector.load %arg13[%c0_32, %c320] : memref<40x512xf32, #tpu.memory_space<vmem>>, vector<38x32xf32>
    tpu.vector_store %arg13[%c0_32, %c320], %29 {strides = array<i32>} : memref<40x512xf32, #tpu.memory_space<vmem>>, vector<38x32xf32>,
    %c26 = arith.constant 26 : index
    %c0_33 = arith.constant 0 : index
    %31 = vector.load %arg12[%c26, %c0_33] : memref<128x32xf32, #tpu.memory_space<vmem>>, vector<38x32xf32>
    %c0_34 = arith.constant 0 : index
    %c352 = arith.constant 352 : index
    %32 = vector.load %arg13[%c0_34, %c352] : memref<40x512xf32, #tpu.memory_space<vmem>>, vector<38x32xf32>
    tpu.vector_store %arg13[%c0_34, %c352], %31 {strides = array<i32>} : memref<40x512xf32, #tpu.memory_space<vmem>>, vector<38x32xf32>,
    %c80 = arith.constant 80 : index
    %c0_35 = arith.constant 0 : index
    %33 = vector.load %arg12[%c80, %c0_35] : memref<128x32xf32, #tpu.memory_space<vmem>>, vector<38x32xf32>
    %c0_36 = arith.constant 0 : index
    %c384 = arith.constant 384 : index
    %34 = vector.load %arg13[%c0_36, %c384] : memref<40x512xf32, #tpu.memory_space<vmem>>, vector<38x32xf32>
    tpu.vector_store %arg13[%c0_36, %c384], %33 {strides = array<i32>} : memref<40x512xf32, #tpu.memory_space<vmem>>, vector<38x32xf32>,
    %c88 = arith.constant 88 : index
    %c0_37 = arith.constant 0 : index
    %35 = vector.load %arg12[%c88, %c0_37] : memref<128x32xf32, #tpu.memory_space<vmem>>, vector<38x32xf32>
    %c0_38 = arith.constant 0 : index
    %c416 = arith.constant 416 : index
    %36 = vector.load %arg13[%c0_38, %c416] : memref<40x512xf32, #tpu.memory_space<vmem>>, vector<38x32xf32>
    tpu.vector_store %arg13[%c0_38, %c416], %35 {strides = array<i32>} : memref<40x512xf32, #tpu.memory_space<vmem>>, vector<38x32xf32>,
    %c82 = arith.constant 82 : index
    %c0_39 = arith.constant 0 : index
    %37 = vector.load %arg12[%c82, %c0_39] : memref<128x32xf32, #tpu.memory_space<vmem>>, vector<38x32xf32>
    %c0_40 = arith.constant 0 : index
    %c448 = arith.constant 448 : index
    %38 = vector.load %arg13[%c0_40, %c448] : memref<40x512xf32, #tpu.memory_space<vmem>>, vector<38x32xf32>
    tpu.vector_store %arg13[%c0_40, %c448], %37 {strides = array<i32>} : memref<40x512xf32, #tpu.memory_space<vmem>>, vector<38x32xf32>,
    %c90 = arith.constant 90 : index
    %c0_41 = arith.constant 0 : index
    %39 = vector.load %arg12[%c90, %c0_41] : memref<128x32xf32, #tpu.memory_space<vmem>>, vector<38x32xf32>
    %c0_42 = arith.constant 0 : index
    %c480 = arith.constant 480 : index
    %40 = vector.load %arg13[%c0_42, %c480] : memref<40x512xf32, #tpu.memory_space<vmem>>, vector<38x32xf32>
    tpu.vector_store %arg13[%c0_42, %c480], %39 {strides = array<i32>} : memref<40x512xf32, #tpu.memory_space<vmem>>, vector<38x32xf32>,
    %c0_43 = arith.constant 0 : index
    %c0_44 = arith.constant 0 : index
    %41 = vector.load %arg13[%c0_43, %c0_44] : memref<40x512xf32, #tpu.memory_space<vmem>>, vector<40x512xf32>
    %c0_45 = arith.constant 0 : index
    %c0_46 = arith.constant 0 : index
    %42 = vector.load %arg3[%c0_45, %c0_46] : memref<512x64xf32, #tpu.memory_space<vmem>>, vector<512x64xf32>
    %cst_47 = arith.constant dense<0.000000e+00> : vector<40x64xf32>
    %43 = tpu.matmul %41, %42, %cst_47 {dimension_numbers = #tpu.dot_dimension_numbers<[1], [0], [0], [1], [0, 0, 1, 1], [], []>} : vector<40x512xf32>, vector<512x64xf32>, vector<40x64xf32> -> vector<40x64xf32>
    %c0_48 = arith.constant 0 : index
    %c0_49 = arith.constant 0 : index
    %44 = vector.load %arg4[%c0_48, %c0_49] : memref<1x64xf32, #tpu.memory_space<vmem>>, vector<1x64xf32>
    %45 = vector.broadcast %44 : vector<1x64xf32> to vector<40x64xf32>
    %46 = arith.addf %43, %45 : vector<40x64xf32>
    %cst_50 = arith.constant 0.000000e+00 : f32
    %47 = vector.broadcast %cst_50 : f32 to vector<40x64xf32>
    %48 = arith.maximumf %46, %47 : vector<40x64xf32>
    %c0_51 = arith.constant 0 : index
    %c0_52 = arith.constant 0 : index
    %49 = vector.load %arg14[%c0_51, %c0_52] : memref<40x64xf32, #tpu.memory_space<vmem>>, vector<40x64xf32>
    tpu.vector_store %arg14[%c0_51, %c0_52], %48 {strides = array<i32>} : memref<40x64xf32, #tpu.memory_space<vmem>>, vector<40x64xf32>,
    %c0_53 = arith.constant 0 : index
    %c0_54 = arith.constant 0 : index
    %50 = vector.load %arg14[%c0_53, %c0_54] : memref<40x64xf32, #tpu.memory_space<vmem>>, vector<2x64xf32>
    %c0_55 = arith.constant 0 : index
    %c0_56 = arith.constant 0 : index
    %51 = vector.load %arg15[%c0_55, %c0_56] : memref<2x576xf32, #tpu.memory_space<vmem>>, vector<2x64xf32>
    tpu.vector_store %arg15[%c0_55, %c0_56], %50 {strides = array<i32>} : memref<2x576xf32, #tpu.memory_space<vmem>>, vector<2x64xf32>,
    %c2_57 = arith.constant 2 : index
    %c0_58 = arith.constant 0 : index
    %52 = vector.load %arg14[%c2_57, %c0_58] : memref<40x64xf32, #tpu.memory_space<vmem>>, vector<2x64xf32>
    %c0_59 = arith.constant 0 : index
    %c64_60 = arith.constant 64 : index
    %53 = vector.load %arg15[%c0_59, %c64_60] : memref<2x576xf32, #tpu.memory_space<vmem>>, vector<2x64xf32>
    tpu.vector_store %arg15[%c0_59, %c64_60], %52 {strides = array<i32>} : memref<2x576xf32, #tpu.memory_space<vmem>>, vector<2x64xf32>,
    %c4 = arith.constant 4 : index
    %c0_61 = arith.constant 0 : index
    %54 = vector.load %arg14[%c4, %c0_61] : memref<40x64xf32, #tpu.memory_space<vmem>>, vector<2x64xf32>
    %c0_62 = arith.constant 0 : index
    %c128_63 = arith.constant 128 : index
    %55 = vector.load %arg15[%c0_62, %c128_63] : memref<2x576xf32, #tpu.memory_space<vmem>>, vector<2x64xf32>
    tpu.vector_store %arg15[%c0_62, %c128_63], %54 {strides = array<i32>} : memref<2x576xf32, #tpu.memory_space<vmem>>, vector<2x64xf32>,
    %c16_64 = arith.constant 16 : index
    %c0_65 = arith.constant 0 : index
    %56 = vector.load %arg14[%c16_64, %c0_65] : memref<40x64xf32, #tpu.memory_space<vmem>>, vector<2x64xf32>
    %c0_66 = arith.constant 0 : index
    %c192_67 = arith.constant 192 : index
    %57 = vector.load %arg15[%c0_66, %c192_67] : memref<2x576xf32, #tpu.memory_space<vmem>>, vector<2x64xf32>
    tpu.vector_store %arg15[%c0_66, %c192_67], %56 {strides = array<i32>} : memref<2x576xf32, #tpu.memory_space<vmem>>, vector<2x64xf32>,
    %c18_68 = arith.constant 18 : index
    %c0_69 = arith.constant 0 : index
    %58 = vector.load %arg14[%c18_68, %c0_69] : memref<40x64xf32, #tpu.memory_space<vmem>>, vector<2x64xf32>
    %c0_70 = arith.constant 0 : index
    %c256_71 = arith.constant 256 : index
    %59 = vector.load %arg15[%c0_70, %c256_71] : memref<2x576xf32, #tpu.memory_space<vmem>>, vector<2x64xf32>
    tpu.vector_store %arg15[%c0_70, %c256_71], %58 {strides = array<i32>} : memref<2x576xf32, #tpu.memory_space<vmem>>, vector<2x64xf32>,
    %c20 = arith.constant 20 : index
    %c0_72 = arith.constant 0 : index
    %60 = vector.load %arg14[%c20, %c0_72] : memref<40x64xf32, #tpu.memory_space<vmem>>, vector<2x64xf32>
    %c0_73 = arith.constant 0 : index
    %c320_74 = arith.constant 320 : index
    %61 = vector.load %arg15[%c0_73, %c320_74] : memref<2x576xf32, #tpu.memory_space<vmem>>, vector<2x64xf32>
    tpu.vector_store %arg15[%c0_73, %c320_74], %60 {strides = array<i32>} : memref<2x576xf32, #tpu.memory_space<vmem>>, vector<2x64xf32>,
    %c32_75 = arith.constant 32 : index
    %c0_76 = arith.constant 0 : index
    %62 = vector.load %arg14[%c32_75, %c0_76] : memref<40x64xf32, #tpu.memory_space<vmem>>, vector<2x64xf32>
    %c0_77 = arith.constant 0 : index
    %c384_78 = arith.constant 384 : index
    %63 = vector.load %arg15[%c0_77, %c384_78] : memref<2x576xf32, #tpu.memory_space<vmem>>, vector<2x64xf32>
    tpu.vector_store %arg15[%c0_77, %c384_78], %62 {strides = array<i32>} : memref<2x576xf32, #tpu.memory_space<vmem>>, vector<2x64xf32>,
    %c34 = arith.constant 34 : index
    %c0_79 = arith.constant 0 : index
    %64 = vector.load %arg14[%c34, %c0_79] : memref<40x64xf32, #tpu.memory_space<vmem>>, vector<2x64xf32>
    %c0_80 = arith.constant 0 : index
    %c448_81 = arith.constant 448 : index
    %65 = vector.load %arg15[%c0_80, %c448_81] : memref<2x576xf32, #tpu.memory_space<vmem>>, vector<2x64xf32>
    tpu.vector_store %arg15[%c0_80, %c448_81], %64 {strides = array<i32>} : memref<2x576xf32, #tpu.memory_space<vmem>>, vector<2x64xf32>,
    %c36 = arith.constant 36 : index
    %c0_82 = arith.constant 0 : index
    %66 = vector.load %arg14[%c36, %c0_82] : memref<40x64xf32, #tpu.memory_space<vmem>>, vector<2x64xf32>
    %c0_83 = arith.constant 0 : index
    %c512 = arith.constant 512 : index
    %67 = vector.load %arg15[%c0_83, %c512] : memref<2x576xf32, #tpu.memory_space<vmem>>, vector<2x64xf32>
    tpu.vector_store %arg15[%c0_83, %c512], %66 {strides = array<i32>} : memref<2x576xf32, #tpu.memory_space<vmem>>, vector<2x64xf32>,
    %c0_84 = arith.constant 0 : index
    %c0_85 = arith.constant 0 : index
    %68 = vector.load %arg15[%c0_84, %c0_85] : memref<2x576xf32, #tpu.memory_space<vmem>>, vector<2x576xf32>
    %c0_86 = arith.constant 0 : index
    %c0_87 = arith.constant 0 : index
    %69 = vector.load %arg5[%c0_86, %c0_87] : memref<576x64xf32, #tpu.memory_space<vmem>>, vector<576x64xf32>
    %cst_88 = arith.constant dense<0.000000e+00> : vector<2x64xf32>
    %70 = tpu.matmul %68, %69, %cst_88 {dimension_numbers = #tpu.dot_dimension_numbers<[1], [0], [0], [1], [0, 0, 1, 1], [], []>} : vector<2x576xf32>, vector<576x64xf32>, vector<2x64xf32> -> vector<2x64xf32>
    %c0_89 = arith.constant 0 : index
    %c0_90 = arith.constant 0 : index
    %71 = vector.load %arg6[%c0_89, %c0_90] : memref<1x64xf32, #tpu.memory_space<vmem>>, vector<1x64xf32>
    %72 = vector.broadcast %71 : vector<1x64xf32> to vector<2x64xf32>
    %73 = arith.addf %70, %72 : vector<2x64xf32>
    %cst_91 = arith.constant 0.000000e+00 : f32
    %74 = vector.broadcast %cst_91 : f32 to vector<2x64xf32>
    %75 = arith.maximumf %73, %74 : vector<2x64xf32>
    %c0_92 = arith.constant 0 : index
    %c0_93 = arith.constant 0 : index
    %76 = vector.load %arg7[%c0_92, %c0_93] : memref<64x512xf32, #tpu.memory_space<vmem>>, vector<64x512xf32>
    %cst_94 = arith.constant dense<0.000000e+00> : vector<2x512xf32>
    %77 = tpu.matmul %75, %76, %cst_94 {dimension_numbers = #tpu.dot_dimension_numbers<[1], [0], [0], [1], [0, 0, 1, 1], [], []>} : vector<2x64xf32>, vector<64x512xf32>, vector<2x512xf32> -> vector<2x512xf32>
    %c0_95 = arith.constant 0 : index
    %c0_96 = arith.constant 0 : index
    %78 = vector.load %arg8[%c0_95, %c0_96] : memref<1x512xf32, #tpu.memory_space<vmem>>, vector<1x512xf32>
    %79 = vector.broadcast %78 : vector<1x512xf32> to vector<2x512xf32>
    %80 = arith.addf %77, %79 : vector<2x512xf32>
    %cst_97 = arith.constant 0.000000e+00 : f32
    %81 = vector.broadcast %cst_97 : f32 to vector<2x512xf32>
    %82 = arith.maximumf %80, %81 : vector<2x512xf32>
    %c0_98 = arith.constant 0 : index
    %c0_99 = arith.constant 0 : index
    %83 = vector.load %arg9[%c0_98, %c0_99] : memref<512x128xf32, #tpu.memory_space<vmem>>, vector<512x128xf32>
    %cst_100 = arith.constant dense<0.000000e+00> : vector<2x128xf32>
    %84 = tpu.matmul %82, %83, %cst_100 {dimension_numbers = #tpu.dot_dimension_numbers<[1], [0], [0], [1], [0, 0, 1, 1], [], []>} : vector<2x512xf32>, vector<512x128xf32>, vector<2x128xf32> -> vector<2x128xf32>
    %c0_101 = arith.constant 0 : index
    %c0_102 = arith.constant 0 : index
    %85 = vector.load %arg10[%c0_101, %c0_102] : memref<1x128xf32, #tpu.memory_space<vmem>>, vector<1x128xf32>
    %86 = vector.broadcast %85 : vector<1x128xf32> to vector<2x128xf32>
    %87 = arith.addf %84, %86 : vector<2x128xf32>
    %c0_103 = arith.constant 0 : index
    %c0_104 = arith.constant 0 : index
    %88 = vector.load %arg11[%c0_103, %c0_104] : memref<2x128xf32, #tpu.memory_space<vmem>>, vector<2x128xf32>
    tpu.vector_store %arg11[%c0_103, %c0_104], %87 {strides = array<i32>} : memref<2x128xf32, #tpu.memory_space<vmem>>, vector<2x128xf32>,
    return
  }
}

</mosaic_0001>

<llo_original>
// kernel: dqn_forward.1
$region0: #{dqn_forward.1}
  #allocation0 [shape = 'u32[]', space=smem, size = 0x4, offset = 0x4, fixed_abs, tag = 'smem constant byte address 0x4 - core index']
  #allocation1 [shape = 'u32[72,128]{1,0:T(1,128)}', space=vmem, size = 0x9000, scoped, tag = 'internal scratch']
  #allocation2 [shape = 'f32[128,32]{1,0:T(8,128)}', space=vmem, size = 0x10000, scoped, tag = 'scratch operand']
  #allocation3 [shape = 'f32[40,512]{1,0:T(8,128)}', space=vmem, size = 0x14000, scoped, tag = 'scratch operand']
  #allocation4 [shape = 'f32[40,64]{1,0:T(8,128)}', space=vmem, size = 0x5000, scoped, tag = 'scratch operand']
  #allocation5 [shape = 'f32[2,576]{1,0:T(2,128)}', space=vmem, size = 0x1400, scoped, tag = 'scratch operand']
  %s0 = inlined_call_operand.vmem [shape: f32[128,256], index: 0, kind: input, shape index: {}]
  %s1 = inlined_call_operand.vmem [shape: f32[256,32], index: 1, kind: input, shape index: {}]
  %s2 = inlined_call_operand.vmem [shape: f32[1,32], index: 2, kind: input, shape index: {}]
  %s3 = inlined_call_operand.vmem [shape: f32[512,64], index: 3, kind: input, shape index: {}]
  %s4 = inlined_call_operand.vmem [shape: f32[1,64], index: 4, kind: input, shape index: {}]
  %s5 = inlined_call_operand.vmem [shape: f32[576,64], index: 5, kind: input, shape index: {}]
  %s6 = inlined_call_operand.vmem [shape: f32[1,64], index: 6, kind: input, shape index: {}]
  %s7 = inlined_call_operand.vmem [shape: f32[64,512], index: 7, kind: input, shape index: {}]
  %s8 = inlined_call_operand.vmem [shape: f32[1,512], index: 8, kind: input, shape index: {}]
  %s9 = inlined_call_operand.vmem [shape: f32[512,128], index: 9, kind: input, shape index: {}]
  %s10 = inlined_call_operand.vmem [shape: f32[1,128], index: 10, kind: input, shape index: {}]
  %s11 = inlined_call_operand.hbm [shape: f32[2,128], index: 11, kind: output, shape index: {}]
  %s12 = sld [smem:[#allocation0]]
  $region54: #{dqn_forward.1} parent=0
    _
  %s14 = ssub.s32 1, %s12
  %s15 = scalar_select 0, %s14, %s12
  $region1: #{dqn_forward.1} parent=0
    #allocation6 [shape = 'u8[1024]{0}', space=vmem, size = 0x400, scoped, tag = 'output window, operand 0, single buffered']
    #allocation7 [shape = 's32[1]{0}', space=sflag, size = 0x4, scoped, tag = 'scoped memory for dqn_forward.1']
    %16 = vsyncpa [#allocation7], 0
    // Predicated region
    $region2: #{dqn_forward.1} parent=1 // pred_check
      _
    $region3: #{dqn_forward.1} parent=1 // pred_check_branch
      %18 = sbr.rel (0) target = $region5
    $region4: #{dqn_forward.1} parent=1 // pred_region
      _
    $region5: #{dqn_forward.1} parent=1 // pred_fallthru
      _
    // Predicated region
    $region6: #{dqn_forward.1} parent=1 // pred_check
      _
    $region7: #{dqn_forward.1} parent=1 // pred_check_branch
      %20 = sbr.rel (0) target = $region9
    $region8: #{dqn_forward.1} parent=1 // pred_region
      _
    $region9: #{dqn_forward.1} parent=1 // pred_fallthru
      _
    // Predicated region
    $region10: #{dqn_forward.1} parent=1 // pred_check
      _
    $region11: #{dqn_forward.1} parent=1 // pred_check_branch
      %22 = sbr.rel (0) target = $region13
    $region12: #{dqn_forward.1} parent=1 // pred_region
      _
    $region13: #{dqn_forward.1} parent=1 // pred_fallthru
      _
    // Predicated region
    $region14: #{dqn_forward.1} parent=1 // pred_check
      _
    $region15: #{dqn_forward.1} parent=1 // pred_check_branch
      %24 = sbr.rel (0) target = $region17
    $region16: #{dqn_forward.1} parent=1 // pred_region
      _
    $region17: #{dqn_forward.1} parent=1 // pred_fallthru
      _
    // Predicated region
    $region18: #{dqn_forward.1} parent=1 // pred_check
      _
    $region19: #{dqn_forward.1} parent=1 // pred_check_branch
      %26 = sbr.rel (0) target = $region21
    $region20: #{dqn_forward.1} parent=1 // pred_region
      _
    $region21: #{dqn_forward.1} parent=1 // pred_fallthru
      _
    // Predicated region
    $region22: #{dqn_forward.1} parent=1 // pred_check
      _
    $region23: #{dqn_forward.1} parent=1 // pred_check_branch
      %28 = sbr.rel (0) target = $region25
    $region24: #{dqn_forward.1} parent=1 // pred_region
      _
    $region25: #{dqn_forward.1} parent=1 // pred_fallthru
      _
    // Predicated region
    $region26: #{dqn_forward.1} parent=1 // pred_check
      _
    $region27: #{dqn_forward.1} parent=1 // pred_check_branch
      %30 = sbr.rel (0) target = $region29
    $region28: #{dqn_forward.1} parent=1 // pred_region
      _
    $region29: #{dqn_forward.1} parent=1 // pred_fallthru
      _
    // Predicated region
    $region30: #{dqn_forward.1} parent=1 // pred_check
      _
    $region31: #{dqn_forward.1} parent=1 // pred_check_branch
      %32 = sbr.rel (0) target = $region33
    $region32: #{dqn_forward.1} parent=1 // pred_region
      _
    $region33: #{dqn_forward.1} parent=1 // pred_fallthru
      _
    // Predicated region
    $region34: #{dqn_forward.1} parent=1 // pred_check
      _
    $region35: #{dqn_forward.1} parent=1 // pred_check_branch
      %34 = sbr.rel (0) target = $region37
    $region36: #{dqn_forward.1} parent=1 // pred_region
      _
    $region37: #{dqn_forward.1} parent=1 // pred_fallthru
      _
    // Predicated region
    $region38: #{dqn_forward.1} parent=1 // pred_check
      _
    $region39: #{dqn_forward.1} parent=1 // pred_check_branch
      %36 = sbr.rel (0) target = $region41
    $region40: #{dqn_forward.1} parent=1 // pred_region
      _
    $region41: #{dqn_forward.1} parent=1 // pred_fallthru
      _
    // Predicated region
    $region42: #{dqn_forward.1} parent=1 // pred_check
      _
    $region43: #{dqn_forward.1} parent=1 // pred_check_branch
      %38 = sbr.rel (0) target = $region45
    $region44: #{dqn_forward.1} parent=1 // pred_region
      _
    $region45: #{dqn_forward.1} parent=1 // pred_fallthru
      _
    %v39 = vld [vmem:[%s0] sm:$0xff]
    %v40 = vld [vmem:[%s0 + $0x8] sm:$0xff]
    %v41 = vld [vmem:[%s0 + $0x10] sm:$0xff]
    %v42 = vld [vmem:[%s0 + $0x18] sm:$0xff]
    %v43 = vld [vmem:[%s0 + $0x20] sm:$0xff]
    %v44 = vld [vmem:[%s0 + $0x28] sm:$0xff]
    %v45 = vld [vmem:[%s0 + $0x30] sm:$0xff]
    %v46 = vld [vmem:[%s0 + $0x38] sm:$0xff]
    %v47 = vld [vmem:[%s0 + $0x40] sm:$0xff]
    %v48 = vld [vmem:[%s0 + $0x48] sm:$0xff]
    %v49 = vld [vmem:[%s0 + $0x50] sm:$0xff]
    %v50 = vld [vmem:[%s0 + $0x58] sm:$0xff]
    %v51 = vld [vmem:[%s0 + $0x60] sm:$0xff]
    %v52 = vld [vmem:[%s0 + $0x68] sm:$0xff]
    %v53 = vld [vmem:[%s0 + $0x70] sm:$0xff]
    %v54 = vld [vmem:[%s0 + $0x78] sm:$0xff]
    %v55 = vld [vmem:[%s0 + $0x80] sm:$0xff]
    %v56 = vld [vmem:[%s0 + $0x88] sm:$0xff]
    %v57 = vld [vmem:[%s0 + $0x90] sm:$0xff]
    %v58 = vld [vmem:[%s0 + $0x98] sm:$0xff]
    %v59 = vld [vmem:[%s0 + $0xa0] sm:$0xff]
    %v60 = vld [vmem:[%s0 + $0xa8] sm:$0xff]
    %v61 = vld [vmem:[%s0 + $0xb0] sm:$0xff]
    %v62 = vld [vmem:[%s0 + $0xb8] sm:$0xff]
    %v63 = vld [vmem:[%s0 + $0xc0] sm:$0xff]
    %v64 = vld [vmem:[%s0 + $0xc8] sm:$0xff]
    %v65 = vld [vmem:[%s0 + $0xd0] sm:$0xff]
    %v66 = vld [vmem:[%s0 + $0xd8] sm:$0xff]
    %v67 = vld [vmem:[%s0 + $0xe0] sm:$0xff]
    %v68 = vld [vmem:[%s0 + $0xe8] sm:$0xff]
    %v69 = vld [vmem:[%s0 + $0xf0] sm:$0xff]
    %v70 = vld [vmem:[%s0 + $0xf8] sm:$0xff]
    %v71 = vld [vmem:[%s1] sm:$0xff]
    %v72 = vld [vmem:[%s1 + $0x8] sm:$0xff]
    %v73 = vld [vmem:[%s1 + $0x10] sm:$0xff]
    %v74 = vld [vmem:[%s1 + $0x18] sm:$0xff]
    %v75 = vld [vmem:[%s1 + $0x20] sm:$0xff]
    %v76 = vld [vmem:[%s1 + $0x28] sm:$0xff]
    %v77 = vld [vmem:[%s1 + $0x30] sm:$0xff]
    %v78 = vld [vmem:[%s1 + $0x38] sm:$0xff]
    %v79 = vld [vmem:[%s1 + $0x40] sm:$0xff]
    %v80 = vld [vmem:[%s1 + $0x48] sm:$0xff]
    %v81 = vld [vmem:[%s1 + $0x50] sm:$0xff]
    %v82 = vld [vmem:[%s1 + $0x58] sm:$0xff]
    %v83 = vld [vmem:[%s1 + $0x60] sm:$0xff]
    %v84 = vld [vmem:[%s1 + $0x68] sm:$0xff]
    %v85 = vld [vmem:[%s1 + $0x70] sm:$0xff]
    %v86 = vld [vmem:[%s1 + $0x78] sm:$0xff]
    %v87 = vld [vmem:[%s1 + $0x80] sm:$0xff]
    %v88 = vld [vmem:[%s1 + $0x88] sm:$0xff]
    %v89 = vld [vmem:[%s1 + $0x90] sm:$0xff]
    %v90 = vld [vmem:[%s1 + $0x98] sm:$0xff]
    %v91 = vld [vmem:[%s1 + $0xa0] sm:$0xff]
    %v92 = vld [vmem:[%s1 + $0xa8] sm:$0xff]
    %v93 = vld [vmem:[%s1 + $0xb0] sm:$0xff]
    %v94 = vld [vmem:[%s1 + $0xb8] sm:$0xff]
    %v95 = vld [vmem:[%s1 + $0xc0] sm:$0xff]
    %v96 = vld [vmem:[%s1 + $0xc8] sm:$0xff]
    %v97 = vld [vmem:[%s1 + $0xd0] sm:$0xff]
    %v98 = vld [vmem:[%s1 + $0xd8] sm:$0xff]
    %v99 = vld [vmem:[%s1 + $0xe0] sm:$0xff]
    %v100 = vld [vmem:[%s1 + $0xe8] sm:$0xff]
    %v101 = vld [vmem:[%s1 + $0xf0] sm:$0xff]
    %v102 = vld [vmem:[%s1 + $0xf8] sm:$0xff]
    %v103 = vld [vmem:[%s2] sm:$0x1]
    %v105 = vperm.slane %v103, 0
    %107 = vmatpush.msra.mxu0 %v86
    %108 = vmatpush.msra.mxu0 %v85
    %109 = vmatpush.msra.mxu0 %v84
    %110 = vmatpush.msra.mxu0 %v83
    %111 = vmatpush.msra.mxu0 %v82
    %112 = vmatpush.msra.mxu0 %v81
    %113 = vmatpush.msra.mxu0 %v80
    %114 = vmatpush.msra.mxu0 %v79
    %115 = vmatpush.msra.mxu0 %v78
    %116 = vmatpush.msra.mxu0 %v77
    %117 = vmatpush.msra.mxu0 %v76
    %118 = vmatpush.msra.mxu0 %v75
    %119 = vmatpush.msra.mxu0 %v74
    %120 = vmatpush.msra.mxu0 %v73
    %121 = vmatpush.msra.mxu0 %v72
    %122 = vmatpush.msra.mxu0 %v71
    %123 = vmatmul.f32.gmra.mxu0 %v39
    %v124 = vpop.f32.mrf.mxu0
    %v125 = vadd.f32 %v105, %v124
    %126 = vmatmul.f32.gmra.mxu0 %v41
    %v127 = vpop.f32.mrf.mxu0
    %v128 = vadd.f32 %v105, %v127
    %129 = vmatmul.f32.gmra.mxu0 %v43
    %v130 = vpop.f32.mrf.mxu0
    %v131 = vadd.f32 %v105, %v130
    %132 = vmatmul.f32.gmra.mxu0 %v45
    %v133 = vpop.f32.mrf.mxu0
    %v134 = vadd.f32 %v105, %v133
    %135 = vmatmul.f32.gmra.mxu0 %v47
    %v136 = vpop.f32.mrf.mxu0
    %v137 = vadd.f32 %v105, %v136
    %138 = vmatmul.f32.gmra.mxu0 %v49
    %v139 = vpop.f32.mrf.mxu0
    %v140 = vadd.f32 %v105, %v139
    %141 = vmatmul.f32.gmra.mxu0 %v51
    %v142 = vpop.f32.mrf.mxu0
    %v143 = vadd.f32 %v105, %v142
    %144 = vmatmul.f32.gmra.mxu0 %v53
    %v145 = vpop.f32.mrf.mxu0
    %v146 = vadd.f32 %v105, %v145
    %147 = vmatmul.f32.gmra.mxu0 %v55
    %v148 = vpop.f32.mrf.mxu0
    %v149 = vadd.f32 %v105, %v148
    %150 = vmatmul.f32.gmra.mxu0 %v57
    %v151 = vpop.f32.mrf.mxu0
    %v152 = vadd.f32 %v105, %v151
    %153 = vmatmul.f32.gmra.mxu0 %v59
    %v154 = vpop.f32.mrf.mxu0
    %v155 = vadd.f32 %v105, %v154
    %156 = vmatmul.f32.gmra.mxu0 %v61
    %v157 = vpop.f32.mrf.mxu0
    %v158 = vadd.f32 %v105, %v157
    %159 = vmatmul.f32.gmra.mxu0 %v63
    %v160 = vpop.f32.mrf.mxu0
    %v161 = vadd.f32 %v105, %v160
    %162 = vmatmul.f32.gmra.mxu0 %v65
    %v163 = vpop.f32.mrf.mxu0
    %v164 = vadd.f32 %v105, %v163
    %165 = vmatmul.f32.gmra.mxu0 %v67
    %v166 = vpop.f32.mrf.mxu0
    %v167 = vadd.f32 %v105, %v166
    %168 = vmatmul.f32.gmra.mxu0 %v69
    %v169 = vpop.f32.mrf.mxu0
    %v170 = vadd.f32 %v105, %v169
    %171 = vdwg.mxu0
    %172 = vmatpush.msra.mxu0 %v102
    %173 = vmatpush.msra.mxu0 %v101
    %174 = vmatpush.msra.mxu0 %v100
    %175 = vmatpush.msra.mxu0 %v99
    %176 = vmatpush.msra.mxu0 %v98
    %177 = vmatpush.msra.mxu0 %v97
    %178 = vmatpush.msra.mxu0 %v96
    %179 = vmatpush.msra.mxu0 %v95
    %180 = vmatpush.msra.mxu0 %v94
    %181 = vmatpush.msra.mxu0 %v93
    %182 = vmatpush.msra.mxu0 %v92
    %183 = vmatpush.msra.mxu0 %v91
    %184 = vmatpush.msra.mxu0 %v90
    %185 = vmatpush.msra.mxu0 %v89
    %186 = vmatpush.msra.mxu0 %v88
    %187 = vmatpush.msra.mxu0 %v87
    %188 = vmatmul.f32.gmra.mxu0 %v40
    %v189 = vpop.f32.mrf.mxu0
    %v190 = vadd.f32 %v125, %v189
    %191 = vmatmul.f32.gmra.mxu0 %v42
    %v192 = vpop.f32.mrf.mxu0
    %v193 = vadd.f32 %v128, %v192
    %194 = vmatmul.f32.gmra.mxu0 %v44
    %v195 = vpop.f32.mrf.mxu0
    %v196 = vadd.f32 %v131, %v195
    %197 = vmatmul.f32.gmra.mxu0 %v46
    %v198 = vpop.f32.mrf.mxu0
    %v199 = vadd.f32 %v134, %v198
    %200 = vmatmul.f32.gmra.mxu0 %v48
    %v201 = vpop.f32.mrf.mxu0
    %v202 = vadd.f32 %v137, %v201
    %203 = vmatmul.f32.gmra.mxu0 %v50
    %v204 = vpop.f32.mrf.mxu0
    %v205 = vadd.f32 %v140, %v204
    %206 = vmatmul.f32.gmra.mxu0 %v52
    %v207 = vpop.f32.mrf.mxu0
    %v208 = vadd.f32 %v143, %v207
    %209 = vmatmul.f32.gmra.mxu0 %v54
    %v210 = vpop.f32.mrf.mxu0
    %v211 = vadd.f32 %v146, %v210
    %212 = vmatmul.f32.gmra.mxu0 %v56
    %v213 = vpop.f32.mrf.mxu0
    %v214 = vadd.f32 %v149, %v213
    %215 = vmatmul.f32.gmra.mxu0 %v58
    %v216 = vpop.f32.mrf.mxu0
    %v217 = vadd.f32 %v152, %v216
    %218 = vmatmul.f32.gmra.mxu0 %v60
    %v219 = vpop.f32.mrf.mxu0
    %v220 = vadd.f32 %v155, %v219
    %221 = vmatmul.f32.gmra.mxu0 %v62
    %v222 = vpop.f32.mrf.mxu0
    %v223 = vadd.f32 %v158, %v222
    %224 = vmatmul.f32.gmra.mxu0 %v64
    %v225 = vpop.f32.mrf.mxu0
    %v226 = vadd.f32 %v161, %v225
    %227 = vmatmul.f32.gmra.mxu0 %v66
    %v228 = vpop.f32.mrf.mxu0
    %v229 = vadd.f32 %v164, %v228
    %230 = vmatmul.f32.gmra.mxu0 %v68
    %v231 = vpop.f32.mrf.mxu0
    %v232 = vadd.f32 %v167, %v231
    %233 = vmatmul.f32.gmra.mxu0 %v70
    %v234 = vpop.f32.mrf.mxu0
    %v235 = vadd.f32 %v170, %v234
    %236 = vdwg.mxu0
    %v237 = vmax.f32 %v190, 0.0
    %v238 = vmax.f32 %v193, 0.0
    %v239 = vmax.f32 %v196, 0.0
    %v240 = vmax.f32 %v199, 0.0
    %v241 = vmax.f32 %v202, 0.0
    %v242 = vmax.f32 %v205, 0.0
    %v243 = vmax.f32 %v208, 0.0
    %v244 = vmax.f32 %v211, 0.0
    %v245 = vmax.f32 %v214, 0.0
    %v246 = vmax.f32 %v217, 0.0
    %v247 = vmax.f32 %v220, 0.0
    %v248 = vmax.f32 %v223, 0.0
    %v249 = vmax.f32 %v226, 0.0
    %v250 = vmax.f32 %v229, 0.0
    %v251 = vmax.f32 %v232, 0.0
    %v252 = vmax.f32 %v235, 0.0
    %vm253 = vcmask 261120
    %254 = vst.msk [vmem:[#allocation2] sm:$0xff] %vm253, %v237
    %255 = vst.msk [vmem:[#allocation2 + $0x8] sm:$0xff] %vm253, %v238
    %256 = vst.msk [vmem:[#allocation2 + $0x10] sm:$0xff] %vm253, %v239
    %257 = vst.msk [vmem:[#allocation2 + $0x18] sm:$0xff] %vm253, %v240
    %258 = vst.msk [vmem:[#allocation2 + $0x20] sm:$0xff] %vm253, %v241
    %259 = vst.msk [vmem:[#allocation2 + $0x28] sm:$0xff] %vm253, %v242
    %260 = vst.msk [vmem:[#allocation2 + $0x30] sm:$0xff] %vm253, %v243
    %261 = vst.msk [vmem:[#allocation2 + $0x38] sm:$0xff] %vm253, %v244
    %262 = vst.msk [vmem:[#allocation2 + $0x40] sm:$0xff] %vm253, %v245
    %263 = vst.msk [vmem:[#allocation2 + $0x48] sm:$0xff] %vm253, %v246
    %264 = vst.msk [vmem:[#allocation2 + $0x50] sm:$0xff] %vm253, %v247
    %265 = vst.msk [vmem:[#allocation2 + $0x58] sm:$0xff] %vm253, %v248
    %266 = vst.msk [vmem:[#allocation2 + $0x60] sm:$0xff] %vm253, %v249
    %267 = vst.msk [vmem:[#allocation2 + $0x68] sm:$0xff] %vm253, %v250
    %268 = vst.msk [vmem:[#allocation2 + $0x70] sm:$0xff] %vm253, %v251
    %269 = vst.msk [vmem:[#allocation2 + $0x78] sm:$0xff] %vm253, %v252
    %v270 = vld [vmem:[#allocation2] sm:$0xff]
    %v271 = vld [vmem:[#allocation2 + $0x8] sm:$0xff]
    %v272 = vld [vmem:[#allocation2 + $0x10] sm:$0xff]
    %v273 = vld [vmem:[#allocation2 + $0x18] sm:$0xff]
    %v274 = vld [vmem:[#allocation2 + $0x20] sm:$0x3f]
    %275 = vst.msk [vmem:[#allocation3] sm:$0xff] %vm253, %v270
    %276 = vst.msk [vmem:[#allocation3 + $0x20] sm:$0xff] %vm253, %v271
    %277 = vst.msk [vmem:[#allocation3 + $0x40] sm:$0xff] %vm253, %v272
    %278 = vst.msk [vmem:[#allocation3 + $0x60] sm:$0xff] %vm253, %v273
    %vm279 = vcmask 259072
    %280 = vst.msk [vmem:[#allocation3 + $0x80] sm:$0x3f] %vm279, %v274
    %v281 = vld [vmem:[#allocation2 + $0x8] sm:$0xff]
    %v282 = vld [vmem:[#allocation2 + $0x10] sm:$0xff]
    %v283 = vld [vmem:[#allocation2 + $0x18] sm:$0xff]
    %v284 = vld [vmem:[#allocation2 + $0x20] sm:$0xff]
    %v285 = vld [vmem:[#allocation2 + $0x28] sm:$0x3f]
    %291 = vrot.lane.b32.xlu0 %v281, 32
    %v292 = vpop.permute.xlu0 %291
    %293 = vrot.lane.b32.xlu0 %v282, 32
    %v294 = vpop.permute.xlu0 %293
    %295 = vrot.lane.b32.xlu0 %v283, 32
    %v296 = vpop.permute.xlu0 %295
    %297 = vrot.lane.b32.xlu0 %v284, 32
    %v298 = vpop.permute.xlu0 %297
    %299 = vrot.lane.b32.xlu0 %v285, 32
    %v300 = vpop.permute.xlu0 %299
    %vm306 = vcmask 523520
    %307 = vst.msk [vmem:[#allocation3] sm:$0xff] %vm306, %v292
    %308 = vst.msk [vmem:[#allocation3 + $0x20] sm:$0xff] %vm306, %v294
    %309 = vst.msk [vmem:[#allocation3 + $0x40] sm:$0xff] %vm306, %v296
    %310 = vst.msk [vmem:[#allocation3 + $0x60] sm:$0xff] %vm306, %v298
    %vm311 = vcmask 521472
    %312 = vst.msk [vmem:[#allocation3 + $0x80] sm:$0x3f] %vm311, %v300
    %v313 = vld [vmem:[#allocation2 + $0x2] sm:$0xff]
    %v314 = vld [vmem:[#allocation2 + $0xa] sm:$0xff]
    %v315 = vld [vmem:[#allocation2 + $0x12] sm:$0xff]
    %v316 = vld [vmem:[#allocation2 + $0x1a] sm:$0xff]
    %v317 = vld [vmem:[#allocation2 + $0x22] sm:$0x3f]
    %323 = vrot.lane.b32.xlu0 %v313, 64
    %v324 = vpop.permute.xlu0 %323
    %325 = vrot.lane.b32.xlu0 %v314, 64
    %v326 = vpop.permute.xlu0 %325
    %327 = vrot.lane.b32.xlu0 %v315, 64
    %v328 = vpop.permute.xlu0 %327
    %329 = vrot.lane.b32.xlu0 %v316, 64
    %v330 = vpop.permute.xlu0 %329
    %331 = vrot.lane.b32.xlu0 %v317, 64
    %v332 = vpop.permute.xlu0 %331
    %vm338 = vcmask 785920
    %339 = vst.msk [vmem:[#allocation3] sm:$0xff] %vm338, %v324
    %340 = vst.msk [vmem:[#allocation3 + $0x20] sm:$0xff] %vm338, %v326
    %341 = vst.msk [vmem:[#allocation3 + $0x40] sm:$0xff] %vm338, %v328
    %342 = vst.msk [vmem:[#allocation3 + $0x60] sm:$0xff] %vm338, %v330
    %vm343 = vcmask 783872
    %344 = vst.msk [vmem:[#allocation3 + $0x80] sm:$0x3f] %vm343, %v332
    %v345 = vld [vmem:[#allocation2 + $0xa] sm:$0xff]
    %v346 = vld [vmem:[#allocation2 + $0x12] sm:$0xff]
    %v347 = vld [vmem:[#allocation2 + $0x1a] sm:$0xff]
    %v348 = vld [vmem:[#allocation2 + $0x22] sm:$0xff]
    %v349 = vld [vmem:[#allocation2 + $0x2a] sm:$0x3f]
    %355 = vrot.lane.b32.xlu0 %v345, 96
    %v356 = vpop.permute.xlu0 %355
    %357 = vrot.lane.b32.xlu0 %v346, 96
    %v358 = vpop.permute.xlu0 %357
    %359 = vrot.lane.b32.xlu0 %v347, 96
    %v360 = vpop.permute.xlu0 %359
    %361 = vrot.lane.b32.xlu0 %v348, 96
    %v362 = vpop.permute.xlu0 %361
    %363 = vrot.lane.b32.xlu0 %v349, 96
    %v364 = vpop.permute.xlu0 %363
    %vm370 = vcmask 1048320
    %371 = vst.msk [vmem:[#allocation3] sm:$0xff] %vm370, %v356
    %372 = vst.msk [vmem:[#allocation3 + $0x20] sm:$0xff] %vm370, %v358
    %373 = vst.msk [vmem:[#allocation3 + $0x40] sm:$0xff] %vm370, %v360
    %374 = vst.msk [vmem:[#allocation3 + $0x60] sm:$0xff] %vm370, %v362
    %vm375 = vcmask 1046272
    %376 = vst.msk [vmem:[#allocation3 + $0x80] sm:$0x3f] %vm375, %v364
    %v377 = vld [vmem:[#allocation2 + $0x40] sm:$0xff]
    %v378 = vld [vmem:[#allocation2 + $0x48] sm:$0xff]
    %v379 = vld [vmem:[#allocation2 + $0x50] sm:$0xff]
    %v380 = vld [vmem:[#allocation2 + $0x58] sm:$0xff]
    %v381 = vld [vmem:[#allocation2 + $0x60] sm:$0x3f]
    %382 = vst.msk [vmem:[#allocation3 + $0x8] sm:$0xff] %vm253, %v377
    %383 = vst.msk [vmem:[#allocation3 + $0x28] sm:$0xff] %vm253, %v378
    %384 = vst.msk [vmem:[#allocation3 + $0x48] sm:$0xff] %vm253, %v379
    %385 = vst.msk [vmem:[#allocation3 + $0x68] sm:$0xff] %vm253, %v380
    %386 = vst.msk [vmem:[#allocation3 + $0x88] sm:$0x3f] %vm279, %v381
    %v387 = vld [vmem:[#allocation2 + $0x48] sm:$0xff]
    %v388 = vld [vmem:[#allocation2 + $0x50] sm:$0xff]
    %v389 = vld [vmem:[#allocation2 + $0x58] sm:$0xff]
    %v390 = vld [vmem:[#allocation2 + $0x60] sm:$0xff]
    %v391 = vld [vmem:[#allocation2 + $0x68] sm:$0x3f]
    %397 = vrot.lane.b32.xlu0 %v387, 32
    %v398 = vpop.permute.xlu0 %397
    %399 = vrot.lane.b32.xlu0 %v388, 32
    %v400 = vpop.permute.xlu0 %399
    %401 = vrot.lane.b32.xlu0 %v389, 32
    %v402 = vpop.permute.xlu0 %401
    %403 = vrot.lane.b32.xlu0 %v390, 32
    %v404 = vpop.permute.xlu0 %403
    %405 = vrot.lane.b32.xlu0 %v391, 32
    %v406 = vpop.permute.xlu0 %405
    %412 = vst.msk [vmem:[#allocation3 + $0x8] sm:$0xff] %vm306, %v398
    %413 = vst.msk [vmem:[#allocation3 + $0x28] sm:$0xff] %vm306, %v400
    %414 = vst.msk [vmem:[#allocation3 + $0x48] sm:$0xff] %vm306, %v402
    %415 = vst.msk [vmem:[#allocation3 + $0x68] sm:$0xff] %vm306, %v404
    %416 = vst.msk [vmem:[#allocation3 + $0x88] sm:$0x3f] %vm311, %v406
    %v417 = vld [vmem:[#allocation2 + $0x42] sm:$0xff]
    %v418 = vld [vmem:[#allocation2 + $0x4a] sm:$0xff]
    %v419 = vld [vmem:[#allocation2 + $0x52] sm:$0xff]
    %v420 = vld [vmem:[#allocation2 + $0x5a] sm:$0xff]
    %v421 = vld [vmem:[#allocation2 + $0x62] sm:$0x3f]
    %427 = vrot.lane.b32.xlu0 %v417, 64
    %v428 = vpop.permute.xlu0 %427
    %429 = vrot.lane.b32.xlu0 %v418, 64
    %v430 = vpop.permute.xlu0 %429
    %431 = vrot.lane.b32.xlu0 %v419, 64
    %v432 = vpop.permute.xlu0 %431
    %433 = vrot.lane.b32.xlu0 %v420, 64
    %v434 = vpop.permute.xlu0 %433
    %435 = vrot.lane.b32.xlu0 %v421, 64
    %v436 = vpop.permute.xlu0 %435
    %442 = vst.msk [vmem:[#allocation3 + $0x8] sm:$0xff] %vm338, %v428
    %443 = vst.msk [vmem:[#allocation3 + $0x28] sm:$0xff] %vm338, %v430
    %444 = vst.msk [vmem:[#allocation3 + $0x48] sm:$0xff] %vm338, %v432
    %445 = vst.msk [vmem:[#allocation3 + $0x68] sm:$0xff] %vm338, %v434
    %446 = vst.msk [vmem:[#allocation3 + $0x88] sm:$0x3f] %vm343, %v436
    %v447 = vld [vmem:[#allocation2 + $0x4a] sm:$0xff]
    %v448 = vld [vmem:[#allocation2 + $0x52] sm:$0xff]
    %v449 = vld [vmem:[#allocation2 + $0x5a] sm:$0xff]
    %v450 = vld [vmem:[#allocation2 + $0x62] sm:$0xff]
    %v451 = vld [vmem:[#allocation2 + $0x6a] sm:$0x3f]
    %457 = vrot.lane.b32.xlu0 %v447, 96
    %v458 = vpop.permute.xlu0 %457
    %459 = vrot.lane.b32.xlu0 %v448, 96
    %v460 = vpop.permute.xlu0 %459
    %461 = vrot.lane.b32.xlu0 %v449, 96
    %v462 = vpop.permute.xlu0 %461
    %463 = vrot.lane.b32.xlu0 %v450, 96
    %v464 = vpop.permute.xlu0 %463
    %465 = vrot.lane.b32.xlu0 %v451, 96
    %v466 = vpop.permute.xlu0 %465
    %472 = vst.msk [vmem:[#allocation3 + $0x8] sm:$0xff] %vm370, %v458
    %473 = vst.msk [vmem:[#allocation3 + $0x28] sm:$0xff] %vm370, %v460
    %474 = vst.msk [vmem:[#allocation3 + $0x48] sm:$0xff] %vm370, %v462
    %475 = vst.msk [vmem:[#allocation3 + $0x68] sm:$0xff] %vm370, %v464
    %476 = vst.msk [vmem:[#allocation3 + $0x88] sm:$0x3f] %vm375, %v466
    %v477 = vld [vmem:[#allocation2 + $0x10] sm:$0xff]
    %v478 = vld [vmem:[#allocation2 + $0x18] sm:$0xff]
    %v479 = vld [vmem:[#allocation2 + $0x20] sm:$0xff]
    %v480 = vld [vmem:[#allocation2 + $0x28] sm:$0xff]
    %v481 = vld [vmem:[#allocation2 + $0x30] sm:$0x3f]
    %482 = vst.msk [vmem:[#allocation3 + $0x10] sm:$0xff] %vm253, %v477
    %483 = vst.msk [vmem:[#allocation3 + $0x30] sm:$0xff] %vm253, %v478
    %484 = vst.msk [vmem:[#allocation3 + $0x50] sm:$0xff] %vm253, %v479
    %485 = vst.msk [vmem:[#allocation3 + $0x70] sm:$0xff] %vm253, %v480
    %486 = vst.msk [vmem:[#allocation3 + $0x90] sm:$0x3f] %vm279, %v481
    %v487 = vld [vmem:[#allocation2 + $0x18] sm:$0xff]
    %v488 = vld [vmem:[#allocation2 + $0x20] sm:$0xff]
    %v489 = vld [vmem:[#allocation2 + $0x28] sm:$0xff]
    %v490 = vld [vmem:[#allocation2 + $0x30] sm:$0xff]
    %v491 = vld [vmem:[#allocation2 + $0x38] sm:$0x3f]
    %497 = vrot.lane.b32.xlu0 %v487, 32
    %v498 = vpop.permute.xlu0 %497
    %499 = vrot.lane.b32.xlu0 %v488, 32
    %v500 = vpop.permute.xlu0 %499
    %501 = vrot.lane.b32.xlu0 %v489, 32
    %v502 = vpop.permute.xlu0 %501
    %503 = vrot.lane.b32.xlu0 %v490, 32
    %v504 = vpop.permute.xlu0 %503
    %505 = vrot.lane.b32.xlu0 %v491, 32
    %v506 = vpop.permute.xlu0 %505
    %512 = vst.msk [vmem:[#allocation3 + $0x10] sm:$0xff] %vm306, %v498
    %513 = vst.msk [vmem:[#allocation3 + $0x30] sm:$0xff] %vm306, %v500
    %514 = vst.msk [vmem:[#allocation3 + $0x50] sm:$0xff] %vm306, %v502
    %515 = vst.msk [vmem:[#allocation3 + $0x70] sm:$0xff] %vm306, %v504
    %516 = vst.msk [vmem:[#allocation3 + $0x90] sm:$0x3f] %vm311, %v506
    %v517 = vld [vmem:[#allocation2 + $0x12] sm:$0xff]
    %v518 = vld [vmem:[#allocation2 + $0x1a] sm:$0xff]
    %v519 = vld [vmem:[#allocation2 + $0x22] sm:$0xff]
    %v520 = vld [vmem:[#allocation2 + $0x2a] sm:$0xff]
    %v521 = vld [vmem:[#allocation2 + $0x32] sm:$0x3f]
    %527 = vrot.lane.b32.xlu0 %v517, 64
    %v528 = vpop.permute.xlu0 %527
    %529 = vrot.lane.b32.xlu0 %v518, 64
    %v530 = vpop.permute.xlu0 %529
    %531 = vrot.lane.b32.xlu0 %v519, 64
    %v532 = vpop.permute.xlu0 %531
    %533 = vrot.lane.b32.xlu0 %v520, 64
    %v534 = vpop.permute.xlu0 %533
    %535 = vrot.lane.b32.xlu0 %v521, 64
    %v536 = vpop.permute.xlu0 %535
    %542 = vst.msk [vmem:[#allocation3 + $0x10] sm:$0xff] %vm338, %v528
    %543 = vst.msk [vmem:[#allocation3 + $0x30] sm:$0xff] %vm338, %v530
    %544 = vst.msk [vmem:[#allocation3 + $0x50] sm:$0xff] %vm338, %v532
    %545 = vst.msk [vmem:[#allocation3 + $0x70] sm:$0xff] %vm338, %v534
    %546 = vst.msk [vmem:[#allocation3 + $0x90] sm:$0x3f] %vm343, %v536
    %v547 = vld [vmem:[#allocation2 + $0x1a] sm:$0xff]
    %v548 = vld [vmem:[#allocation2 + $0x22] sm:$0xff]
    %v549 = vld [vmem:[#allocation2 + $0x2a] sm:$0xff]
    %v550 = vld [vmem:[#allocation2 + $0x32] sm:$0xff]
    %v551 = vld [vmem:[#allocation2 + $0x3a] sm:$0x3f]
    %557 = vrot.lane.b32.xlu0 %v547, 96
    %v558 = vpop.permute.xlu0 %557
    %559 = vrot.lane.b32.xlu0 %v548, 96
    %v560 = vpop.permute.xlu0 %559
    %561 = vrot.lane.b32.xlu0 %v549, 96
    %v562 = vpop.permute.xlu0 %561
    %563 = vrot.lane.b32.xlu0 %v550, 96
    %v564 = vpop.permute.xlu0 %563
    %565 = vrot.lane.b32.xlu0 %v551, 96
    %v566 = vpop.permute.xlu0 %565
    %572 = vst.msk [vmem:[#allocation3 + $0x10] sm:$0xff] %vm370, %v558
    %573 = vst.msk [vmem:[#allocation3 + $0x30] sm:$0xff] %vm370, %v560
    %574 = vst.msk [vmem:[#allocation3 + $0x50] sm:$0xff] %vm370, %v562
    %575 = vst.msk [vmem:[#allocation3 + $0x70] sm:$0xff] %vm370, %v564
    %576 = vst.msk [vmem:[#allocation3 + $0x90] sm:$0x3f] %vm375, %v566
    %v577 = vld [vmem:[#allocation2 + $0x50] sm:$0xff]
    %v578 = vld [vmem:[#allocation2 + $0x58] sm:$0xff]
    %v579 = vld [vmem:[#allocation2 + $0x60] sm:$0xff]
    %v580 = vld [vmem:[#allocation2 + $0x68] sm:$0xff]
    %v581 = vld [vmem:[#allocation2 + $0x70] sm:$0x3f]
    %582 = vst.msk [vmem:[#allocation3 + $0x18] sm:$0xff] %vm253, %v577
    %583 = vst.msk [vmem:[#allocation3 + $0x38] sm:$0xff] %vm253, %v578
    %584 = vst.msk [vmem:[#allocation3 + $0x58] sm:$0xff] %vm253, %v579
    %585 = vst.msk [vmem:[#allocation3 + $0x78] sm:$0xff] %vm253, %v580
    %586 = vst.msk [vmem:[#allocation3 + $0x98] sm:$0x3f] %vm279, %v581
    %v587 = vld [vmem:[#allocation2 + $0x58] sm:$0xff]
    %v588 = vld [vmem:[#allocation2 + $0x60] sm:$0xff]
    %v589 = vld [vmem:[#allocation2 + $0x68] sm:$0xff]
    %v590 = vld [vmem:[#allocation2 + $0x70] sm:$0xff]
    %v591 = vld [vmem:[#allocation2 + $0x78] sm:$0x3f]
    %597 = vrot.lane.b32.xlu0 %v587, 32
    %v598 = vpop.permute.xlu0 %597
    %599 = vrot.lane.b32.xlu0 %v588, 32
    %v600 = vpop.permute.xlu0 %599
    %601 = vrot.lane.b32.xlu0 %v589, 32
    %v602 = vpop.permute.xlu0 %601
    %603 = vrot.lane.b32.xlu0 %v590, 32
    %v604 = vpop.permute.xlu0 %603
    %605 = vrot.lane.b32.xlu0 %v591, 32
    %v606 = vpop.permute.xlu0 %605
    %612 = vst.msk [vmem:[#allocation3 + $0x18] sm:$0xff] %vm306, %v598
    %613 = vst.msk [vmem:[#allocation3 + $0x38] sm:$0xff] %vm306, %v600
    %614 = vst.msk [vmem:[#allocation3 + $0x58] sm:$0xff] %vm306, %v602
    %615 = vst.msk [vmem:[#allocation3 + $0x78] sm:$0xff] %vm306, %v604
    %616 = vst.msk [vmem:[#allocation3 + $0x98] sm:$0x3f] %vm311, %v606
    %v617 = vld [vmem:[#allocation2 + $0x52] sm:$0xff]
    %v618 = vld [vmem:[#allocation2 + $0x5a] sm:$0xff]
    %v619 = vld [vmem:[#allocation2 + $0x62] sm:$0xff]
    %v620 = vld [vmem:[#allocation2 + $0x6a] sm:$0xff]
    %v621 = vld [vmem:[#allocation2 + $0x72] sm:$0x3f]
    %627 = vrot.lane.b32.xlu0 %v617, 64
    %v628 = vpop.permute.xlu0 %627
    %629 = vrot.lane.b32.xlu0 %v618, 64
    %v630 = vpop.permute.xlu0 %629
    %631 = vrot.lane.b32.xlu0 %v619, 64
    %v632 = vpop.permute.xlu0 %631
    %633 = vrot.lane.b32.xlu0 %v620, 64
    %v634 = vpop.permute.xlu0 %633
    %635 = vrot.lane.b32.xlu0 %v621, 64
    %v636 = vpop.permute.xlu0 %635
    %642 = vst.msk [vmem:[#allocation3 + $0x18] sm:$0xff] %vm338, %v628
    %643 = vst.msk [vmem:[#allocation3 + $0x38] sm:$0xff] %vm338, %v630
    %644 = vst.msk [vmem:[#allocation3 + $0x58] sm:$0xff] %vm338, %v632
    %645 = vst.msk [vmem:[#allocation3 + $0x78] sm:$0xff] %vm338, %v634
    %646 = vst.msk [vmem:[#allocation3 + $0x98] sm:$0x3f] %vm343, %v636
    %v647 = vld [vmem:[#allocation2 + $0x5a] sm:$0xff]
    %v648 = vld [vmem:[#allocation2 + $0x62] sm:$0xff]
    %v649 = vld [vmem:[#allocation2 + $0x6a] sm:$0xff]
    %v650 = vld [vmem:[#allocation2 + $0x72] sm:$0xff]
    %v651 = vld [vmem:[#allocation2 + $0x7a] sm:$0x3f]
    %657 = vrot.lane.b32.xlu0 %v647, 96
    %v658 = vpop.permute.xlu0 %657
    %659 = vrot.lane.b32.xlu0 %v648, 96
    %v660 = vpop.permute.xlu0 %659
    %661 = vrot.lane.b32.xlu0 %v649, 96
    %v662 = vpop.permute.xlu0 %661
    %663 = vrot.lane.b32.xlu0 %v650, 96
    %v664 = vpop.permute.xlu0 %663
    %665 = vrot.lane.b32.xlu0 %v651, 96
    %v666 = vpop.permute.xlu0 %665
    %672 = vst.msk [vmem:[#allocation3 + $0x18] sm:$0xff] %vm370, %v658
    %673 = vst.msk [vmem:[#allocation3 + $0x38] sm:$0xff] %vm370, %v660
    %674 = vst.msk [vmem:[#allocation3 + $0x58] sm:$0xff] %vm370, %v662
    %675 = vst.msk [vmem:[#allocation3 + $0x78] sm:$0xff] %vm370, %v664
    %676 = vst.msk [vmem:[#allocation3 + $0x98] sm:$0x3f] %vm375, %v666
    %v677 = vld [vmem:[#allocation3] sm:$0xff]
    %v678 = vld [vmem:[#allocation3 + $0x8] sm:$0xff]
    %v679 = vld [vmem:[#allocation3 + $0x10] sm:$0xff]
    %v680 = vld [vmem:[#allocation3 + $0x18] sm:$0xff]
    %v681 = vld [vmem:[#allocation3 + $0x20] sm:$0xff]
    %v682 = vld [vmem:[#allocation3 + $0x28] sm:$0xff]
    %v683 = vld [vmem:[#allocation3 + $0x30] sm:$0xff]
    %v684 = vld [vmem:[#allocation3 + $0x38] sm:$0xff]
    %v685 = vld [vmem:[#allocation3 + $0x40] sm:$0xff]
    %v686 = vld [vmem:[#allocation3 + $0x48] sm:$0xff]
    %v687 = vld [vmem:[#allocation3 + $0x50] sm:$0xff]
    %v688 = vld [vmem:[#allocation3 + $0x58] sm:$0xff]
    %v689 = vld [vmem:[#allocation3 + $0x60] sm:$0xff]
    %v690 = vld [vmem:[#allocation3 + $0x68] sm:$0xff]
    %v691 = vld [vmem:[#allocation3 + $0x70] sm:$0xff]
    %v692 = vld [vmem:[#allocation3 + $0x78] sm:$0xff]
    %v693 = vld [vmem:[#allocation3 + $0x80] sm:$0xff]
    %v694 = vld [vmem:[#allocation3 + $0x88] sm:$0xff]
    %v695 = vld [vmem:[#allocation3 + $0x90] sm:$0xff]
    %v696 = vld [vmem:[#allocation3 + $0x98] sm:$0xff]
    %v697 = vld [vmem:[%s3] sm:$0xff]
    %v698 = vld [vmem:[%s3 + $0x8] sm:$0xff]
    %v699 = vld [vmem:[%s3 + $0x10] sm:$0xff]
    %v700 = vld [vmem:[%s3 + $0x18] sm:$0xff]
    %v701 = vld [vmem:[%s3 + $0x20] sm:$0xff]
    %v702 = vld [vmem:[%s3 + $0x28] sm:$0xff]
    %v703 = vld [vmem:[%s3 + $0x30] sm:$0xff]
    %v704 = vld [vmem:[%s3 + $0x38] sm:$0xff]
    %v705 = vld [vmem:[%s3 + $0x40] sm:$0xff]
    %v706 = vld [vmem:[%s3 + $0x48] sm:$0xff]
    %v707 = vld [vmem:[%s3 + $0x50] sm:$0xff]
    %v708 = vld [vmem:[%s3 + $0x58] sm:$0xff]
    %v709 = vld [vmem:[%s3 + $0x60] sm:$0xff]
    %v710 = vld [vmem:[%s3 + $0x68] sm:$0xff]
    %v711 = vld [vmem:[%s3 + $0x70] sm:$0xff]
    %v712 = vld [vmem:[%s3 + $0x78] sm:$0xff]
    %v713 = vld [vmem:[%s3 + $0x80] sm:$0xff]
    %v714 = vld [vmem:[%s3 + $0x88] sm:$0xff]
    %v715 = vld [vmem:[%s3 + $0x90] sm:$0xff]
    %v716 = vld [vmem:[%s3 + $0x98] sm:$0xff]
    %v717 = vld [vmem:[%s3 + $0xa0] sm:$0xff]
    %v718 = vld [vmem:[%s3 + $0xa8] sm:$0xff]
    %v719 = vld [vmem:[%s3 + $0xb0] sm:$0xff]
    %v720 = vld [vmem:[%s3 + $0xb8] sm:$0xff]
    %v721 = vld [vmem:[%s3 + $0xc0] sm:$0xff]
    %v722 = vld [vmem:[%s3 + $0xc8] sm:$0xff]
    %v723 = vld [vmem:[%s3 + $0xd0] sm:$0xff]
    %v724 = vld [vmem:[%s3 + $0xd8] sm:$0xff]
    %v725 = vld [vmem:[%s3 + $0xe0] sm:$0xff]
    %v726 = vld [vmem:[%s3 + $0xe8] sm:$0xff]
    %v727 = vld [vmem:[%s3 + $0xf0] sm:$0xff]
    %v728 = vld [vmem:[%s3 + $0xf8] sm:$0xff]
    %v729 = vld [vmem:[%s3 + $0x100] sm:$0xff]
    %v730 = vld [vmem:[%s3 + $0x108] sm:$0xff]
    %v731 = vld [vmem:[%s3 + $0x110] sm:$0xff]
    %v732 = vld [vmem:[%s3 + $0x118] sm:$0xff]
    %v733 = vld [vmem:[%s3 + $0x120] sm:$0xff]
    %v734 = vld [vmem:[%s3 + $0x128] sm:$0xff]
    %v735 = vld [vmem:[%s3 + $0x130] sm:$0xff]
    %v736 = vld [vmem:[%s3 + $0x138] sm:$0xff]
    %v737 = vld [vmem:[%s3 + $0x140] sm:$0xff]
    %v738 = vld [vmem:[%s3 + $0x148] sm:$0xff]
    %v739 = vld [vmem:[%s3 + $0x150] sm:$0xff]
    %v740 = vld [vmem:[%s3 + $0x158] sm:$0xff]
    %v741 = vld [vmem:[%s3 + $0x160] sm:$0xff]
    %v742 = vld [vmem:[%s3 + $0x168] sm:$0xff]
    %v743 = vld [vmem:[%s3 + $0x170] sm:$0xff]
    %v744 = vld [vmem:[%s3 + $0x178] sm:$0xff]
    %v745 = vld [vmem:[%s3 + $0x180] sm:$0xff]
    %v746 = vld [vmem:[%s3 + $0x188] sm:$0xff]
    %v747 = vld [vmem:[%s3 + $0x190] sm:$0xff]
    %v748 = vld [vmem:[%s3 + $0x198] sm:$0xff]
    %v749 = vld [vmem:[%s3 + $0x1a0] sm:$0xff]
    %v750 = vld [vmem:[%s3 + $0x1a8] sm:$0xff]
    %v751 = vld [vmem:[%s3 + $0x1b0] sm:$0xff]
    %v752 = vld [vmem:[%s3 + $0x1b8] sm:$0xff]
    %v753 = vld [vmem:[%s3 + $0x1c0] sm:$0xff]
    %v754 = vld [vmem:[%s3 + $0x1c8] sm:$0xff]
    %v755 = vld [vmem:[%s3 + $0x1d0] sm:$0xff]
    %v756 = vld [vmem:[%s3 + $0x1d8] sm:$0xff]
    %v757 = vld [vmem:[%s3 + $0x1e0] sm:$0xff]
    %v758 = vld [vmem:[%s3 + $0x1e8] sm:$0xff]
    %v759 = vld [vmem:[%s3 + $0x1f0] sm:$0xff]
    %v760 = vld [vmem:[%s3 + $0x1f8] sm:$0xff]
    %v761 = vld [vmem:[%s4] sm:$0x1]
    %v763 = vperm.slane %v761, 0
    %765 = vmatpush.msra.mxu0 %v712
    %766 = vmatpush.msra.mxu0 %v711
    %767 = vmatpush.msra.mxu0 %v710
    %768 = vmatpush.msra.mxu0 %v709
    %769 = vmatpush.msra.mxu0 %v708
    %770 = vmatpush.msra.mxu0 %v707
    %771 = vmatpush.msra.mxu0 %v706
    %772 = vmatpush.msra.mxu0 %v705
    %773 = vmatpush.msra.mxu0 %v704
    %774 = vmatpush.msra.mxu0 %v703
    %775 = vmatpush.msra.mxu0 %v702
    %776 = vmatpush.msra.mxu0 %v701
    %777 = vmatpush.msra.mxu0 %v700
    %778 = vmatpush.msra.mxu0 %v699
    %779 = vmatpush.msra.mxu0 %v698
    %780 = vmatpush.msra.mxu0 %v697
    %781 = vmatmul.f32.gmra.mxu0 %v677
    %v782 = vpop.f32.mrf.mxu0
    %v783 = vadd.f32 %v763, %v782
    %784 = vmatmul.f32.gmra.mxu0 %v681
    %v785 = vpop.f32.mrf.mxu0
    %v786 = vadd.f32 %v763, %v785
    %787 = vmatmul.f32.gmra.mxu0 %v685
    %v788 = vpop.f32.mrf.mxu0
    %v789 = vadd.f32 %v763, %v788
    %790 = vmatmul.f32.gmra.mxu0 %v689
    %v791 = vpop.f32.mrf.mxu0
    %v792 = vadd.f32 %v763, %v791
    %793 = vmatmul.f32.gmra.mxu0 %v693
    %v794 = vpop.f32.mrf.mxu0
    %v795 = vadd.f32 %v763, %v794
    %796 = vdwg.mxu0
    %797 = vmatpush.msra.mxu0 %v728
    %798 = vmatpush.msra.mxu0 %v727
    %799 = vmatpush.msra.mxu0 %v726
    %800 = vmatpush.msra.mxu0 %v725
    %801 = vmatpush.msra.mxu0 %v724
    %802 = vmatpush.msra.mxu0 %v723
    %803 = vmatpush.msra.mxu0 %v722
    %804 = vmatpush.msra.mxu0 %v721
    %805 = vmatpush.msra.mxu0 %v720
    %806 = vmatpush.msra.mxu0 %v719
    %807 = vmatpush.msra.mxu0 %v718
    %808 = vmatpush.msra.mxu0 %v717
    %809 = vmatpush.msra.mxu0 %v716
    %810 = vmatpush.msra.mxu0 %v715
    %811 = vmatpush.msra.mxu0 %v714
    %812 = vmatpush.msra.mxu0 %v713
    %813 = vmatmul.f32.gmra.mxu0 %v678
    %v814 = vpop.f32.mrf.mxu0
    %v815 = vadd.f32 %v783, %v814
    %816 = vmatmul.f32.gmra.mxu0 %v682
    %v817 = vpop.f32.mrf.mxu0
    %v818 = vadd.f32 %v786, %v817
    %819 = vmatmul.f32.gmra.mxu0 %v686
    %v820 = vpop.f32.mrf.mxu0
    %v821 = vadd.f32 %v789, %v820
    %822 = vmatmul.f32.gmra.mxu0 %v690
    %v823 = vpop.f32.mrf.mxu0
    %v824 = vadd.f32 %v792, %v823
    %825 = vmatmul.f32.gmra.mxu0 %v694
    %v826 = vpop.f32.mrf.mxu0
    %v827 = vadd.f32 %v795, %v826
    %828 = vdwg.mxu0
    %829 = vmatpush.msra.mxu0 %v744
    %830 = vmatpush.msra.mxu0 %v743
    %831 = vmatpush.msra.mxu0 %v742
    %832 = vmatpush.msra.mxu0 %v741
    %833 = vmatpush.msra.mxu0 %v740
    %834 = vmatpush.msra.mxu0 %v739
    %835 = vmatpush.msra.mxu0 %v738
    %836 = vmatpush.msra.mxu0 %v737
    %837 = vmatpush.msra.mxu0 %v736
    %838 = vmatpush.msra.mxu0 %v735
    %839 = vmatpush.msra.mxu0 %v734
    %840 = vmatpush.msra.mxu0 %v733
    %841 = vmatpush.msra.mxu0 %v732
    %842 = vmatpush.msra.mxu0 %v731
    %843 = vmatpush.msra.mxu0 %v730
    %844 = vmatpush.msra.mxu0 %v729
    %845 = vmatmul.f32.gmra.mxu0 %v679
    %v846 = vpop.f32.mrf.mxu0
    %v847 = vadd.f32 %v815, %v846
    %848 = vmatmul.f32.gmra.mxu0 %v683
    %v849 = vpop.f32.mrf.mxu0
    %v850 = vadd.f32 %v818, %v849
    %851 = vmatmul.f32.gmra.mxu0 %v687
    %v852 = vpop.f32.mrf.mxu0
    %v853 = vadd.f32 %v821, %v852
    %854 = vmatmul.f32.gmra.mxu0 %v691
    %v855 = vpop.f32.mrf.mxu0
    %v856 = vadd.f32 %v824, %v855
    %857 = vmatmul.f32.gmra.mxu0 %v695
    %v858 = vpop.f32.mrf.mxu0
    %v859 = vadd.f32 %v827, %v858
    %860 = vdwg.mxu0
    %861 = vmatpush.msra.mxu0 %v760
    %862 = vmatpush.msra.mxu0 %v759
    %863 = vmatpush.msra.mxu0 %v758
    %864 = vmatpush.msra.mxu0 %v757
    %865 = vmatpush.msra.mxu0 %v756
    %866 = vmatpush.msra.mxu0 %v755
    %867 = vmatpush.msra.mxu0 %v754
    %868 = vmatpush.msra.mxu0 %v753
    %869 = vmatpush.msra.mxu0 %v752
    %870 = vmatpush.msra.mxu0 %v751
    %871 = vmatpush.msra.mxu0 %v750
    %872 = vmatpush.msra.mxu0 %v749
    %873 = vmatpush.msra.mxu0 %v748
    %874 = vmatpush.msra.mxu0 %v747
    %875 = vmatpush.msra.mxu0 %v746
    %876 = vmatpush.msra.mxu0 %v745
    %877 = vmatmul.f32.gmra.mxu0 %v680
    %v878 = vpop.f32.mrf.mxu0
    %v879 = vadd.f32 %v847, %v878
    %880 = vmatmul.f32.gmra.mxu0 %v684
    %v881 = vpop.f32.mrf.mxu0
    %v882 = vadd.f32 %v850, %v881
    %883 = vmatmul.f32.gmra.mxu0 %v688
    %v884 = vpop.f32.mrf.mxu0
    %v885 = vadd.f32 %v853, %v884
    %886 = vmatmul.f32.gmra.mxu0 %v692
    %v887 = vpop.f32.mrf.mxu0
    %v888 = vadd.f32 %v856, %v887
    %889 = vmatmul.f32.gmra.mxu0 %v696
    %v890 = vpop.f32.mrf.mxu0
    %v891 = vadd.f32 %v859, %v890
    %892 = vdwg.mxu0
    %v893 = vmax.f32 %v879, 0.0
    %v894 = vmax.f32 %v882, 0.0
    %v895 = vmax.f32 %v885, 0.0
    %v896 = vmax.f32 %v888, 0.0
    %v897 = vmax.f32 %v891, 0.0
    %vm898 = vcmask 523264
    %899 = vst.msk [vmem:[#allocation4] sm:$0xff] %vm898, %v893
    %900 = vst.msk [vmem:[#allocation4 + $0x8] sm:$0xff] %vm898, %v894
    %901 = vst.msk [vmem:[#allocation4 + $0x10] sm:$0xff] %vm898, %v895
    %902 = vst.msk [vmem:[#allocation4 + $0x18] sm:$0xff] %vm898, %v896
    %903 = vst.msk [vmem:[#allocation4 + $0x20] sm:$0xff] %vm898, %v897
    %v904 = vld [vmem:[#allocation4] sm:$0x3]
    %vm905 = vcmask 517120
    %906 = vst.msk [vmem:[#allocation5] sm:$0x3] %vm905, %v904
    %v907 = vld [vmem:[#allocation4 + $0x2] sm:$0x3]
    %909 = vrot.lane.b32.xlu0 %v907, 64
    %v910 = vpop.permute.xlu0 %909
    %vm912 = vcmask 1041920
    %913 = vst.msk [vmem:[#allocation5] sm:$0x3] %vm912, %v910
    %v914 = vld [vmem:[#allocation4 + $0x4] sm:$0x3]
    %915 = vst.msk [vmem:[#allocation5 + $0x2] sm:$0x3] %vm905, %v914
    %v916 = vld [vmem:[#allocation4 + $0x10] sm:$0x3]
    %918 = vrot.lane.b32.xlu0 %v916, 64
    %v919 = vpop.permute.xlu0 %918
    %921 = vst.msk [vmem:[#allocation5 + $0x2] sm:$0x3] %vm912, %v919
    %v922 = vld [vmem:[#allocation4 + $0x12] sm:$0x3]
    %923 = vst.msk [vmem:[#allocation5 + $0x4] sm:$0x3] %vm905, %v922
    %v924 = vld [vmem:[#allocation4 + $0x14] sm:$0x3]
    %926 = vrot.lane.b32.xlu0 %v924, 64
    %v927 = vpop.permute.xlu0 %926
    %929 = vst.msk [vmem:[#allocation5 + $0x4] sm:$0x3] %vm912, %v927
    %v930 = vld [vmem:[#allocation4 + $0x20] sm:$0x3]
    %931 = vst.msk [vmem:[#allocation5 + $0x6] sm:$0x3] %vm905, %v930
    %v932 = vld [vmem:[#allocation4 + $0x22] sm:$0x3]
    %934 = vrot.lane.b32.xlu0 %v932, 64
    %v935 = vpop.permute.xlu0 %934
    %937 = vst.msk [vmem:[#allocation5 + $0x6] sm:$0x3] %vm912, %v935
    %v938 = vld [vmem:[#allocation4 + $0x24] sm:$0x3]
    %939 = vst.msk [vmem:[#allocation5 + $0x8] sm:$0x3] %vm905, %v938
    %v940 = vld [vmem:[#allocation5] sm:$0xff]
    %v941 = vld [vmem:[#allocation5 + $0x8] sm:$0x3]
    %v942 = vld [vmem:[%s5] sm:$0xff]
    %v943 = vld [vmem:[%s5 + $0x8] sm:$0xff]
    %v944 = vld [vmem:[%s5 + $0x10] sm:$0xff]
    %v945 = vld [vmem:[%s5 + $0x18] sm:$0xff]
    %v946 = vld [vmem:[%s5 + $0x20] sm:$0xff]
    %v947 = vld [vmem:[%s5 + $0x28] sm:$0xff]
    %v948 = vld [vmem:[%s5 + $0x30] sm:$0xff]
    %v949 = vld [vmem:[%s5 + $0x38] sm:$0xff]
    %v950 = vld [vmem:[%s5 + $0x40] sm:$0xff]
    %v951 = vld [vmem:[%s5 + $0x48] sm:$0xff]
    %v952 = vld [vmem:[%s5 + $0x50] sm:$0xff]
    %v953 = vld [vmem:[%s5 + $0x58] sm:$0xff]
    %v954 = vld [vmem:[%s5 + $0x60] sm:$0xff]
    %v955 = vld [vmem:[%s5 + $0x68] sm:$0xff]
    %v956 = vld [vmem:[%s5 + $0x70] sm:$0xff]
    %v957 = vld [vmem:[%s5 + $0x78] sm:$0xff]
    %v958 = vld [vmem:[%s5 + $0x80] sm:$0xff]
    %v959 = vld [vmem:[%s5 + $0x88] sm:$0xff]
    %v960 = vld [vmem:[%s5 + $0x90] sm:$0xff]
    %v961 = vld [vmem:[%s5 + $0x98] sm:$0xff]
    %v962 = vld [vmem:[%s5 + $0xa0] sm:$0xff]
    %v963 = vld [vmem:[%s5 + $0xa8] sm:$0xff]
    %v964 = vld [vmem:[%s5 + $0xb0] sm:$0xff]
    %v965 = vld [vmem:[%s5 + $0xb8] sm:$0xff]
    %v966 = vld [vmem:[%s5 + $0xc0] sm:$0xff]
    %v967 = vld [vmem:[%s5 + $0xc8] sm:$0xff]
    %v968 = vld [vmem:[%s5 + $0xd0] sm:$0xff]
    %v969 = vld [vmem:[%s5 + $0xd8] sm:$0xff]
    %v970 = vld [vmem:[%s5 + $0xe0] sm:$0xff]
    %v971 = vld [vmem:[%s5 + $0xe8] sm:$0xff]
    %v972 = vld [vmem:[%s5 + $0xf0] sm:$0xff]
    %v973 = vld [vmem:[%s5 + $0xf8] sm:$0xff]
    %v974 = vld [vmem:[%s5 + $0x100] sm:$0xff]
    %v975 = vld [vmem:[%s5 + $0x108] sm:$0xff]
    %v976 = vld [vmem:[%s5 + $0x110] sm:$0xff]
    %v977 = vld [vmem:[%s5 + $0x118] sm:$0xff]
    %v978 = vld [vmem:[%s5 + $0x120] sm:$0xff]
    %v979 = vld [vmem:[%s5 + $0x128] sm:$0xff]
    %v980 = vld [vmem:[%s5 + $0x130] sm:$0xff]
    %v981 = vld [vmem:[%s5 + $0x138] sm:$0xff]
    %v982 = vld [vmem:[%s5 + $0x140] sm:$0xff]
    %v983 = vld [vmem:[%s5 + $0x148] sm:$0xff]
    %v984 = vld [vmem:[%s5 + $0x150] sm:$0xff]
    %v985 = vld [vmem:[%s5 + $0x158] sm:$0xff]
    %v986 = vld [vmem:[%s5 + $0x160] sm:$0xff]
    %v987 = vld [vmem:[%s5 + $0x168] sm:$0xff]
    %v988 = vld [vmem:[%s5 + $0x170] sm:$0xff]
    %v989 = vld [vmem:[%s5 + $0x178] sm:$0xff]
    %v990 = vld [vmem:[%s5 + $0x180] sm:$0xff]
    %v991 = vld [vmem:[%s5 + $0x188] sm:$0xff]
    %v992 = vld [vmem:[%s5 + $0x190] sm:$0xff]
    %v993 = vld [vmem:[%s5 + $0x198] sm:$0xff]
    %v994 = vld [vmem:[%s5 + $0x1a0] sm:$0xff]
    %v995 = vld [vmem:[%s5 + $0x1a8] sm:$0xff]
    %v996 = vld [vmem:[%s5 + $0x1b0] sm:$0xff]
    %v997 = vld [vmem:[%s5 + $0x1b8] sm:$0xff]
    %v998 = vld [vmem:[%s5 + $0x1c0] sm:$0xff]
    %v999 = vld [vmem:[%s5 + $0x1c8] sm:$0xff]
    %v1000 = vld [vmem:[%s5 + $0x1d0] sm:$0xff]
    %v1001 = vld [vmem:[%s5 + $0x1d8] sm:$0xff]
    %v1002 = vld [vmem:[%s5 + $0x1e0] sm:$0xff]
    %v1003 = vld [vmem:[%s5 + $0x1e8] sm:$0xff]
    %v1004 = vld [vmem:[%s5 + $0x1f0] sm:$0xff]
    %v1005 = vld [vmem:[%s5 + $0x1f8] sm:$0xff]
    %v1006 = vld [vmem:[%s5 + $0x200] sm:$0xff]
    %v1007 = vld [vmem:[%s5 + $0x208] sm:$0xff]
    %v1008 = vld [vmem:[%s5 + $0x210] sm:$0xff]
    %v1009 = vld [vmem:[%s5 + $0x218] sm:$0xff]
    %v1010 = vld [vmem:[%s5 + $0x220] sm:$0xff]
    %v1011 = vld [vmem:[%s5 + $0x228] sm:$0xff]
    %v1012 = vld [vmem:[%s5 + $0x230] sm:$0xff]
    %v1013 = vld [vmem:[%s5 + $0x238] sm:$0xff]
    %v1014 = vld [vmem:[%s6] sm:$0x1]
    %v1016 = vperm.slane %v1014, 0
    %1020 = vst [vmem:[#allocation1] ss:$4 sm:$0xff] %v940
    %s1021 = scalar_lea.vmem [#allocation1], 32
    %1022 = vst [vmem:[%s1021] ss:$4 sm:$0xff] %v941
    %v1023 = vld.sshfl [vmem:[#allocation1] sm:$0xff pattern:$0x73625140]
    %v1024 = vld.sshfl [vmem:[#allocation1 + $0x8] sm:$0xff pattern:$0x73625140]
    %v1025 = vld.sshfl [vmem:[#allocation1 + $0x10] sm:$0xff pattern:$0x73625140]
    %v1026 = vld.sshfl [vmem:[#allocation1 + $0x18] sm:$0xff pattern:$0x73625140]
    %v1027 = vld.sshfl [vmem:[#allocation1 + $0x20] sm:$0xff pattern:$0x73625140]
    %v1032 = vsel %vm898, %v1027, 0
    %1034 = vmatpush.msra.mxu0 %v957
    %1035 = vmatpush.msra.mxu0 %v956
    %1036 = vmatpush.msra.mxu0 %v955
    %1037 = vmatpush.msra.mxu0 %v954
    %1038 = vmatpush.msra.mxu0 %v953
    %1039 = vmatpush.msra.mxu0 %v952
    %1040 = vmatpush.msra.mxu0 %v951
    %1041 = vmatpush.msra.mxu0 %v950
    %1042 = vmatpush.msra.mxu0 %v949
    %1043 = vmatpush.msra.mxu0 %v948
    %1044 = vmatpush.msra.mxu0 %v947
    %1045 = vmatpush.msra.mxu0 %v946
    %1046 = vmatpush.msra.mxu0 %v945
    %1047 = vmatpush.msra.mxu0 %v944
    %1048 = vmatpush.msra.mxu0 %v943
    %1049 = vmatpush.msra.mxu0 %v942
    %1050 = vmatmul.f32.gmra.mxu0 %v1023
    %v1051 = vpop.f32.mrf.mxu0
    %v1052 = vadd.f32 %v1016, %v1051
    %1053 = vdwg.mxu0
    %1054 = vmatpush.msra.mxu0 %v973
    %1055 = vmatpush.msra.mxu0 %v972
    %1056 = vmatpush.msra.mxu0 %v971
    %1057 = vmatpush.msra.mxu0 %v970
    %1058 = vmatpush.msra.mxu0 %v969
    %1059 = vmatpush.msra.mxu0 %v968
    %1060 = vmatpush.msra.mxu0 %v967
    %1061 = vmatpush.msra.mxu0 %v966
    %1062 = vmatpush.msra.mxu0 %v965
    %1063 = vmatpush.msra.mxu0 %v964
    %1064 = vmatpush.msra.mxu0 %v963
    %1065 = vmatpush.msra.mxu0 %v962
    %1066 = vmatpush.msra.mxu0 %v961
    %1067 = vmatpush.msra.mxu0 %v960
    %1068 = vmatpush.msra.mxu0 %v959
    %1069 = vmatpush.msra.mxu0 %v958
    %1070 = vmatmul.f32.gmra.mxu0 %v1024
    %v1071 = vpop.f32.mrf.mxu0
    %v1072 = vadd.f32 %v1052, %v1071
    %1073 = vdwg.mxu0
    %1074 = vmatpush.msra.mxu0 %v989
    %1075 = vmatpush.msra.mxu0 %v988
    %1076 = vmatpush.msra.mxu0 %v987
    %1077 = vmatpush.msra.mxu0 %v986
    %1078 = vmatpush.msra.mxu0 %v985
    %1079 = vmatpush.msra.mxu0 %v984
    %1080 = vmatpush.msra.mxu0 %v983
    %1081 = vmatpush.msra.mxu0 %v982
    %1082 = vmatpush.msra.mxu0 %v981
    %1083 = vmatpush.msra.mxu0 %v980
    %1084 = vmatpush.msra.mxu0 %v979
    %1085 = vmatpush.msra.mxu0 %v978
    %1086 = vmatpush.msra.mxu0 %v977
    %1087 = vmatpush.msra.mxu0 %v976
    %1088 = vmatpush.msra.mxu0 %v975
    %1089 = vmatpush.msra.mxu0 %v974
    %1090 = vmatmul.f32.gmra.mxu0 %v1025
    %v1091 = vpop.f32.mrf.mxu0
    %v1092 = vadd.f32 %v1072, %v1091
    %1093 = vdwg.mxu0
    %1094 = vmatpush.msra.mxu0 %v1005
    %1095 = vmatpush.msra.mxu0 %v1004
    %1096 = vmatpush.msra.mxu0 %v1003
    %1097 = vmatpush.msra.mxu0 %v1002
    %1098 = vmatpush.msra.mxu0 %v1001
    %1099 = vmatpush.msra.mxu0 %v1000
    %1100 = vmatpush.msra.mxu0 %v999
    %1101 = vmatpush.msra.mxu0 %v998
    %1102 = vmatpush.msra.mxu0 %v997
    %1103 = vmatpush.msra.mxu0 %v996
    %1104 = vmatpush.msra.mxu0 %v995
    %1105 = vmatpush.msra.mxu0 %v994
    %1106 = vmatpush.msra.mxu0 %v993
    %1107 = vmatpush.msra.mxu0 %v992
    %1108 = vmatpush.msra.mxu0 %v991
    %1109 = vmatpush.msra.mxu0 %v990
    %1110 = vmatmul.f32.gmra.mxu0 %v1026
    %v1111 = vpop.f32.mrf.mxu0
    %v1112 = vadd.f32 %v1092, %v1111
    %1113 = vdwg.mxu0
    %1114 = vmatpush.msra.mxu0 0.0
    %1115 = vmatpush.msra.mxu0 0.0
    %1116 = vmatpush.msra.mxu0 0.0
    %1117 = vmatpush.msra.mxu0 0.0
    %1118 = vmatpush.msra.mxu0 0.0
    %1119 = vmatpush.msra.mxu0 0.0
    %1120 = vmatpush.msra.mxu0 0.0
    %1121 = vmatpush.msra.mxu0 0.0
    %1122 = vmatpush.msra.mxu0 %v1013
    %1123 = vmatpush.msra.mxu0 %v1012
    %1124 = vmatpush.msra.mxu0 %v1011
    %1125 = vmatpush.msra.mxu0 %v1010
    %1126 = vmatpush.msra.mxu0 %v1009
    %1127 = vmatpush.msra.mxu0 %v1008
    %1128 = vmatpush.msra.mxu0 %v1007
    %1129 = vmatpush.msra.mxu0 %v1006
    %1130 = vmatmul.f32.gmra.mxu0 %v1032
    %v1131 = vpop.f32.mrf.mxu0
    %v1132 = vadd.f32 %v1112, %v1131
    %1133 = vdwg.mxu0
    %v1134 = vmax.f32 %v1132, 0.0
    %v1135 = vld [vmem:[%s7] sm:$0xff]
    %v1136 = vld [vmem:[%s7 + $0x8] sm:$0xff]
    %v1137 = vld [vmem:[%s7 + $0x10] sm:$0xff]
    %v1138 = vld [vmem:[%s7 + $0x18] sm:$0xff]
    %v1139 = vld [vmem:[%s7 + $0x20] sm:$0xff]
    %v1140 = vld [vmem:[%s7 + $0x28] sm:$0xff]
    %v1141 = vld [vmem:[%s7 + $0x30] sm:$0xff]
    %v1142 = vld [vmem:[%s7 + $0x38] sm:$0xff]
    %v1143 = vld [vmem:[%s7 + $0x40] sm:$0xff]
    %v1144 = vld [vmem:[%s7 + $0x48] sm:$0xff]
    %v1145 = vld [vmem:[%s7 + $0x50] sm:$0xff]
    %v1146 = vld [vmem:[%s7 + $0x58] sm:$0xff]
    %v1147 = vld [vmem:[%s7 + $0x60] sm:$0xff]
    %v1148 = vld [vmem:[%s7 + $0x68] sm:$0xff]
    %v1149 = vld [vmem:[%s7 + $0x70] sm:$0xff]
    %v1150 = vld [vmem:[%s7 + $0x78] sm:$0xff]
    %v1151 = vld [vmem:[%s7 + $0x80] sm:$0xff]
    %v1152 = vld [vmem:[%s7 + $0x88] sm:$0xff]
    %v1153 = vld [vmem:[%s7 + $0x90] sm:$0xff]
    %v1154 = vld [vmem:[%s7 + $0x98] sm:$0xff]
    %v1155 = vld [vmem:[%s7 + $0xa0] sm:$0xff]
    %v1156 = vld [vmem:[%s7 + $0xa8] sm:$0xff]
    %v1157 = vld [vmem:[%s7 + $0xb0] sm:$0xff]
    %v1158 = vld [vmem:[%s7 + $0xb8] sm:$0xff]
    %v1159 = vld [vmem:[%s7 + $0xc0] sm:$0xff]
    %v1160 = vld [vmem:[%s7 + $0xc8] sm:$0xff]
    %v1161 = vld [vmem:[%s7 + $0xd0] sm:$0xff]
    %v1162 = vld [vmem:[%s7 + $0xd8] sm:$0xff]
    %v1163 = vld [vmem:[%s7 + $0xe0] sm:$0xff]
    %v1164 = vld [vmem:[%s7 + $0xe8] sm:$0xff]
    %v1165 = vld [vmem:[%s7 + $0xf0] sm:$0xff]
    %v1166 = vld [vmem:[%s7 + $0xf8] sm:$0xff]
    %v1167 = vld [vmem:[%s8] sm:$0xf]
    %v1169 = vperm.slane %v1167, 0
    %v1170 = vperm.slane %v1167, 1
    %v1171 = vperm.slane %v1167, 2
    %v1172 = vperm.slane %v1167, 3
    %v1178 = vsel %vm898, %v1134, 0
    %1180 = vmatpush.msra.mxu0 0.0
    %1181 = vmatpush.msra.mxu0 0.0
    %1182 = vmatpush.msra.mxu0 0.0
    %1183 = vmatpush.msra.mxu0 0.0
    %1184 = vmatpush.msra.mxu0 0.0
    %1185 = vmatpush.msra.mxu0 0.0
    %1186 = vmatpush.msra.mxu0 0.0
    %1187 = vmatpush.msra.mxu0 0.0
    %1188 = vmatpush.msra.mxu0 %v1163
    %1189 = vmatpush.msra.mxu0 %v1159
    %1190 = vmatpush.msra.mxu0 %v1155
    %1191 = vmatpush.msra.mxu0 %v1151
    %1192 = vmatpush.msra.mxu0 %v1147
    %1193 = vmatpush.msra.mxu0 %v1143
    %1194 = vmatpush.msra.mxu0 %v1139
    %1195 = vmatpush.msra.mxu0 %v1135
    %1196 = vmatmul.f32.gmra.mxu0 %v1178
    %v1197 = vpop.f32.mrf.mxu0
    %v1198 = vadd.f32 %v1169, %v1197
    %1199 = vdwg.mxu0
    %1200 = vmatpush.msra.mxu0 0.0
    %1201 = vmatpush.msra.mxu0 0.0
    %1202 = vmatpush.msra.mxu0 0.0
    %1203 = vmatpush.msra.mxu0 0.0
    %1204 = vmatpush.msra.mxu0 0.0
    %1205 = vmatpush.msra.mxu0 0.0
    %1206 = vmatpush.msra.mxu0 0.0
    %1207 = vmatpush.msra.mxu0 0.0
    %1208 = vmatpush.msra.mxu0 %v1164
    %1209 = vmatpush.msra.mxu0 %v1160
    %1210 = vmatpush.msra.mxu0 %v1156
    %1211 = vmatpush.msra.mxu0 %v1152
    %1212 = vmatpush.msra.mxu0 %v1148
    %1213 = vmatpush.msra.mxu0 %v1144
    %1214 = vmatpush.msra.mxu0 %v1140
    %1215 = vmatpush.msra.mxu0 %v1136
    %1216 = vmatmul.f32.gmra.mxu0 %v1178
    %v1217 = vpop.f32.mrf.mxu0
    %v1218 = vadd.f32 %v1170, %v1217
    %1219 = vdwg.mxu0
    %1220 = vmatpush.msra.mxu0 0.0
    %1221 = vmatpush.msra.mxu0 0.0
    %1222 = vmatpush.msra.mxu0 0.0
    %1223 = vmatpush.msra.mxu0 0.0
    %1224 = vmatpush.msra.mxu0 0.0
    %1225 = vmatpush.msra.mxu0 0.0
    %1226 = vmatpush.msra.mxu0 0.0
    %1227 = vmatpush.msra.mxu0 0.0
    %1228 = vmatpush.msra.mxu0 %v1165
    %1229 = vmatpush.msra.mxu0 %v1161
    %1230 = vmatpush.msra.mxu0 %v1157
    %1231 = vmatpush.msra.mxu0 %v1153
    %1232 = vmatpush.msra.mxu0 %v1149
    %1233 = vmatpush.msra.mxu0 %v1145
    %1234 = vmatpush.msra.mxu0 %v1141
    %1235 = vmatpush.msra.mxu0 %v1137
    %1236 = vmatmul.f32.gmra.mxu0 %v1178
    %v1237 = vpop.f32.mrf.mxu0
    %v1238 = vadd.f32 %v1171, %v1237
    %1239 = vdwg.mxu0
    %1240 = vmatpush.msra.mxu0 0.0
    %1241 = vmatpush.msra.mxu0 0.0
    %1242 = vmatpush.msra.mxu0 0.0
    %1243 = vmatpush.msra.mxu0 0.0
    %1244 = vmatpush.msra.mxu0 0.0
    %1245 = vmatpush.msra.mxu0 0.0
    %1246 = vmatpush.msra.mxu0 0.0
    %1247 = vmatpush.msra.mxu0 0.0
    %1248 = vmatpush.msra.mxu0 %v1166
    %1249 = vmatpush.msra.mxu0 %v1162
    %1250 = vmatpush.msra.mxu0 %v1158
    %1251 = vmatpush.msra.mxu0 %v1154
    %1252 = vmatpush.msra.mxu0 %v1150
    %1253 = vmatpush.msra.mxu0 %v1146
    %1254 = vmatpush.msra.mxu0 %v1142
    %1255 = vmatpush.msra.mxu0 %v1138
    %1256 = vmatmul.f32.gmra.mxu0 %v1178
    %v1257 = vpop.f32.mrf.mxu0
    %v1258 = vadd.f32 %v1172, %v1257
    %1259 = vdwg.mxu0
    %v1260 = vmax.f32 %v1198, 0.0
    %v1261 = vmax.f32 %v1218, 0.0
    %v1262 = vmax.f32 %v1238, 0.0
    %v1263 = vmax.f32 %v1258, 0.0
    %v1264 = vld [vmem:[%s9] sm:$0xff]
    %v1265 = vld [vmem:[%s9 + $0x8] sm:$0xff]
    %v1266 = vld [vmem:[%s9 + $0x10] sm:$0xff]
    %v1267 = vld [vmem:[%s9 + $0x18] sm:$0xff]
    %v1268 = vld [vmem:[%s9 + $0x20] sm:$0xff]
    %v1269 = vld [vmem:[%s9 + $0x28] sm:$0xff]
    %v1270 = vld [vmem:[%s9 + $0x30] sm:$0xff]
    %v1271 = vld [vmem:[%s9 + $0x38] sm:$0xff]
    %v1272 = vld [vmem:[%s9 + $0x40] sm:$0xff]
    %v1273 = vld [vmem:[%s9 + $0x48] sm:$0xff]
    %v1274 = vld [vmem:[%s9 + $0x50] sm:$0xff]
    %v1275 = vld [vmem:[%s9 + $0x58] sm:$0xff]
    %v1276 = vld [vmem:[%s9 + $0x60] sm:$0xff]
    %v1277 = vld [vmem:[%s9 + $0x68] sm:$0xff]
    %v1278 = vld [vmem:[%s9 + $0x70] sm:$0xff]
    %v1279 = vld [vmem:[%s9 + $0x78] sm:$0xff]
    %v1280 = vld [vmem:[%s9 + $0x80] sm:$0xff]
    %v1281 = vld [vmem:[%s9 + $0x88] sm:$0xff]
    %v1282 = vld [vmem:[%s9 + $0x90] sm:$0xff]
    %v1283 = vld [vmem:[%s9 + $0x98] sm:$0xff]
    %v1284 = vld [vmem:[%s9 + $0xa0] sm:$0xff]
    %v1285 = vld [vmem:[%s9 + $0xa8] sm:$0xff]
    %v1286 = vld [vmem:[%s9 + $0xb0] sm:$0xff]
    %v1287 = vld [vmem:[%s9 + $0xb8] sm:$0xff]
    %v1288 = vld [vmem:[%s9 + $0xc0] sm:$0xff]
    %v1289 = vld [vmem:[%s9 + $0xc8] sm:$0xff]
    %v1290 = vld [vmem:[%s9 + $0xd0] sm:$0xff]
    %v1291 = vld [vmem:[%s9 + $0xd8] sm:$0xff]
    %v1292 = vld [vmem:[%s9 + $0xe0] sm:$0xff]
    %v1293 = vld [vmem:[%s9 + $0xe8] sm:$0xff]
    %v1294 = vld [vmem:[%s9 + $0xf0] sm:$0xff]
    %v1295 = vld [vmem:[%s9 + $0xf8] sm:$0xff]
    %v1296 = vld [vmem:[%s9 + $0x100] sm:$0xff]
    %v1297 = vld [vmem:[%s9 + $0x108] sm:$0xff]
    %v1298 = vld [vmem:[%s9 + $0x110] sm:$0xff]
    %v1299 = vld [vmem:[%s9 + $0x118] sm:$0xff]
    %v1300 = vld [vmem:[%s9 + $0x120] sm:$0xff]
    %v1301 = vld [vmem:[%s9 + $0x128] sm:$0xff]
    %v1302 = vld [vmem:[%s9 + $0x130] sm:$0xff]
    %v1303 = vld [vmem:[%s9 + $0x138] sm:$0xff]
    %v1304 = vld [vmem:[%s9 + $0x140] sm:$0xff]
    %v1305 = vld [vmem:[%s9 + $0x148] sm:$0xff]
    %v1306 = vld [vmem:[%s9 + $0x150] sm:$0xff]
    %v1307 = vld [vmem:[%s9 + $0x158] sm:$0xff]
    %v1308 = vld [vmem:[%s9 + $0x160] sm:$0xff]
    %v1309 = vld [vmem:[%s9 + $0x168] sm:$0xff]
    %v1310 = vld [vmem:[%s9 + $0x170] sm:$0xff]
    %v1311 = vld [vmem:[%s9 + $0x178] sm:$0xff]
    %v1312 = vld [vmem:[%s9 + $0x180] sm:$0xff]
    %v1313 = vld [vmem:[%s9 + $0x188] sm:$0xff]
    %v1314 = vld [vmem:[%s9 + $0x190] sm:$0xff]
    %v1315 = vld [vmem:[%s9 + $0x198] sm:$0xff]
    %v1316 = vld [vmem:[%s9 + $0x1a0] sm:$0xff]
    %v1317 = vld [vmem:[%s9 + $0x1a8] sm:$0xff]
    %v1318 = vld [vmem:[%s9 + $0x1b0] sm:$0xff]
    %v1319 = vld [vmem:[%s9 + $0x1b8] sm:$0xff]
    %v1320 = vld [vmem:[%s9 + $0x1c0] sm:$0xff]
    %v1321 = vld [vmem:[%s9 + $0x1c8] sm:$0xff]
    %v1322 = vld [vmem:[%s9 + $0x1d0] sm:$0xff]
    %v1323 = vld [vmem:[%s9 + $0x1d8] sm:$0xff]
    %v1324 = vld [vmem:[%s9 + $0x1e0] sm:$0xff]
    %v1325 = vld [vmem:[%s9 + $0x1e8] sm:$0xff]
    %v1326 = vld [vmem:[%s9 + $0x1f0] sm:$0xff]
    %v1327 = vld [vmem:[%s9 + $0x1f8] sm:$0xff]
    %v1328 = vld [vmem:[%s10] sm:$0x1]
    %v1330 = vperm.slane %v1328, 0
    %1332 = vmatpush.msra.mxu0 %v1279
    %1333 = vmatpush.msra.mxu0 %v1278
    %1334 = vmatpush.msra.mxu0 %v1277
    %1335 = vmatpush.msra.mxu0 %v1276
    %1336 = vmatpush.msra.mxu0 %v1275
    %1337 = vmatpush.msra.mxu0 %v1274
    %1338 = vmatpush.msra.mxu0 %v1273
    %1339 = vmatpush.msra.mxu0 %v1272
    %1340 = vmatpush.msra.mxu0 %v1271
    %1341 = vmatpush.msra.mxu0 %v1270
    %1342 = vmatpush.msra.mxu0 %v1269
    %1343 = vmatpush.msra.mxu0 %v1268
    %1344 = vmatpush.msra.mxu0 %v1267
    %1345 = vmatpush.msra.mxu0 %v1266
    %1346 = vmatpush.msra.mxu0 %v1265
    %1347 = vmatpush.msra.mxu0 %v1264
    %1348 = vmatmul.f32.gmra.mxu0 %v1260
    %v1349 = vpop.f32.mrf.mxu0
    %v1350 = vadd.f32 %v1330, %v1349
    %1351 = vdwg.mxu0
    %1352 = vmatpush.msra.mxu0 %v1295
    %1353 = vmatpush.msra.mxu0 %v1294
    %1354 = vmatpush.msra.mxu0 %v1293
    %1355 = vmatpush.msra.mxu0 %v1292
    %1356 = vmatpush.msra.mxu0 %v1291
    %1357 = vmatpush.msra.mxu0 %v1290
    %1358 = vmatpush.msra.mxu0 %v1289
    %1359 = vmatpush.msra.mxu0 %v1288
    %1360 = vmatpush.msra.mxu0 %v1287
    %1361 = vmatpush.msra.mxu0 %v1286
    %1362 = vmatpush.msra.mxu0 %v1285
    %1363 = vmatpush.msra.mxu0 %v1284
    %1364 = vmatpush.msra.mxu0 %v1283
    %1365 = vmatpush.msra.mxu0 %v1282
    %1366 = vmatpush.msra.mxu0 %v1281
    %1367 = vmatpush.msra.mxu0 %v1280
    %1368 = vmatmul.f32.gmra.mxu0 %v1261
    %v1369 = vpop.f32.mrf.mxu0
    %v1370 = vadd.f32 %v1350, %v1369
    %1371 = vdwg.mxu0
    %1372 = vmatpush.msra.mxu0 %v1311
    %1373 = vmatpush.msra.mxu0 %v1310
    %1374 = vmatpush.msra.mxu0 %v1309
    %1375 = vmatpush.msra.mxu0 %v1308
    %1376 = vmatpush.msra.mxu0 %v1307
    %1377 = vmatpush.msra.mxu0 %v1306
    %1378 = vmatpush.msra.mxu0 %v1305
    %1379 = vmatpush.msra.mxu0 %v1304
    %1380 = vmatpush.msra.mxu0 %v1303
    %1381 = vmatpush.msra.mxu0 %v1302
    %1382 = vmatpush.msra.mxu0 %v1301
    %1383 = vmatpush.msra.mxu0 %v1300
    %1384 = vmatpush.msra.mxu0 %v1299
    %1385 = vmatpush.msra.mxu0 %v1298
    %1386 = vmatpush.msra.mxu0 %v1297
    %1387 = vmatpush.msra.mxu0 %v1296
    %1388 = vmatmul.f32.gmra.mxu0 %v1262
    %v1389 = vpop.f32.mrf.mxu0
    %v1390 = vadd.f32 %v1370, %v1389
    %1391 = vdwg.mxu0
    %1392 = vmatpush.msra.mxu0 %v1327
    %1393 = vmatpush.msra.mxu0 %v1326
    %1394 = vmatpush.msra.mxu0 %v1325
    %1395 = vmatpush.msra.mxu0 %v1324
    %1396 = vmatpush.msra.mxu0 %v1323
    %1397 = vmatpush.msra.mxu0 %v1322
    %1398 = vmatpush.msra.mxu0 %v1321
    %1399 = vmatpush.msra.mxu0 %v1320
    %1400 = vmatpush.msra.mxu0 %v1319
    %1401 = vmatpush.msra.mxu0 %v1318
    %1402 = vmatpush.msra.mxu0 %v1317
    %1403 = vmatpush.msra.mxu0 %v1316
    %1404 = vmatpush.msra.mxu0 %v1315
    %1405 = vmatpush.msra.mxu0 %v1314
    %1406 = vmatpush.msra.mxu0 %v1313
    %1407 = vmatpush.msra.mxu0 %v1312
    %1408 = vmatmul.f32.gmra.mxu0 %v1263
    %v1409 = vpop.f32.mrf.mxu0
    %v1410 = vadd.f32 %v1390, %v1409
    %1411 = vdwg.mxu0
    %1412 = vst [vmem:[#allocation6] sm:$0x3] %v1410
    // Predicated region
    $region46: #{dqn_forward.1} parent=1 // pred_check
      _
    $region47: #{dqn_forward.1} parent=1 // pred_check_branch
      %1414 = sbr.rel (0) target = $region49
    $region48: #{dqn_forward.1} parent=1 // pred_region
      %1416 = vsyncadd [#allocation7], 0
      %s1418 = sshll.u32 [#allocation6], 4
      %s1419 = int_to_ptr.vmem [resolvable:$true] %s1418
      %s1420 = sshll.u32 %s11, 4
      %s1421 = int_to_ptr.hbm [resolvable:$true] %s1420
      %1423 = dma.vmem_to_hbm [thread:$0]  %s1419, 32, %s1421, [#allocation7]
    $region49: #{dqn_forward.1} parent=1 // pred_fallthru
      _
    // Predicated region
    $region50: #{dqn_forward.1} parent=1 // pred_check
      _
    $region51: #{dqn_forward.1} parent=1 // pred_check_branch
      %1425 = sbr.rel (0) target = $region53
    $region52: #{dqn_forward.1} parent=1 // pred_region
      %1427 = dma.done [#allocation7], 32
    $region53: #{dqn_forward.1} parent=1 // pred_fallthru
      _
    %1428 = vsyncpa [#allocation7], 1

</llo_original>
